<compile_context>
chip_gen: v6e
topology: v6e:2x2x1
jax: 0.10.0
libtpu: 0.0.40
codegen_flags: <defaults>
</compile_context>

<pallas_src>
import functools

import jax
import jax.numpy as jnp
from jax import lax
from jax.experimental import pallas as pl
from jax.experimental.pallas import tpu as pltpu


def _residual_conv_kernel(x_ref, w1_ref, w2_ref, b1_ref, b2_ref, m_ref,
                          out_ref, *, W):
    """One image per grid step, channels-first flat-spatial layout.

    x_ref:  (1, C, H*W)  compute dtype (bf16 or f32)
    w*_ref: (9, C, C)    per-tap weights (tap k = ky*3 + kx), BN scale folded
    b*_ref: (C, 1)       folded BN bias, f32
    m_ref:  (4, 1, H*W)  factored masks [row(-1), row(+1), col(-1), col(+1)]
    out_ref:(1, C, H*W)  f32  (lane-dense store: last dim = H*W >= 128)
    """
    C, HW = x_ref.shape[1], x_ref.shape[2]
    cdt = x_ref.dtype

    x = x_ref[0]                                        # (C, HW)

    # Factored boundary masks (valid-region indicators).
    rmask = {-1: m_ref[0], 1: m_ref[1]}                 # (1, HW) each
    cmask = {-1: m_ref[2], 1: m_ref[3]}

    def conv3x3(inp, w_ref, b_ref):
        # f32 accumulator initialized with the folded BN bias (no epilogue add).
        acc = jnp.broadcast_to(b_ref[...], (C, HW)).astype(jnp.float32)

        # Row-shifted, row-masked variants (shared by the 3 column taps each).
        rows = []
        for oy in (-1, 0, 1):
            if oy == 0:
                rows.append(inp)
            else:
                r = pltpu.roll(inp, shift=(-oy * W) % HW, axis=1)
                rows.append(r * rmask[oy])

        # Each tap: optional lane roll (XLU) + column mask (VPU) + MXU matmul.
        for k in range(9):
            oy, ox = k // 3 - 1, k % 3 - 1
            base = rows[oy + 1]
            if ox == 0:
                tap = base
            else:
                tap = pltpu.roll(base, shift=(-ox) % HW, axis=1) * cmask[ox]
            acc = acc + jnp.dot(w_ref[k], tap,
                                preferred_element_type=jnp.float32)
        return acc                                       # (C, HW) f32

    # conv1 (BN1 scale folded into w1, bias in acc init) -> ReLU
    out1 = jnp.maximum(conv3x3(x, w1_ref, b1_ref), 0.0)

    # conv2 (BN2 folded) -> + residual -> ReLU
    acc2 = conv3x3(out1.astype(cdt), w2_ref, b2_ref)
    out_ref[0] = jnp.maximum(acc2 + x.astype(jnp.float32), 0.0)


def residual_conv(x_nchw, w1_oihw, w2_oihw, g1, be1, m1, v1, g2, be2, m2, v2,
                  eps=1e-5, compute_dtype=jnp.bfloat16):
    """x_nchw: (N, C, H, W) float32. Returns (N, C, H, W) float32."""
    N, C, H, W = x_nchw.shape
    HW = H * W

    # Fold eval-mode BN into a per-output-channel weight scale + bias.
    s1 = (g1 / jnp.sqrt(v1 + eps)).astype(jnp.float32)
    s2 = (g2 / jnp.sqrt(v2 + eps)).astype(jnp.float32)
    b1 = (be1 - m1 * s1).astype(jnp.float32).reshape(C, 1)
    b2 = (be2 - m2 * s2).astype(jnp.float32).reshape(C, 1)

    # OIHW -> (9, Cout, Cin), tap-major (k = ky*3 + kx), BN scale folded along
    # Cout, cast to the matmul compute dtype.
    def prep_w(w, s):
        w = w.astype(jnp.float32) * s.reshape(C, 1, 1, 1)
        return jnp.transpose(w, (2, 3, 0, 1)).reshape(9, C, C).astype(
            compute_dtype)

    w1 = prep_w(w1_oihw, s1)
    w2 = prep_w(w2_oihw, s2)

    # Factored boundary masks (row(-1), row(+1), col(-1), col(+1)), computed
    # once as wrapper glue; constant index_map -> DMA'd once, kept resident.
    row = jnp.arange(H).reshape(H, 1)
    col = jnp.arange(W).reshape(1, W)
    masks = []
    for oy in (-1, 1):
        masks.append(jnp.broadcast_to((row + oy >= 0) & (row + oy < H),
                                      (H, W)).reshape(1, HW))
    for ox in (-1, 1):
        masks.append(jnp.broadcast_to((col + ox >= 0) & (col + ox < W),
                                      (H, W)).reshape(1, HW))
    mask_arr = jnp.stack(masks, axis=0).astype(compute_dtype)     # (4, 1, HW)

    # Stay channels-first; flatten spatial onto the lane axis (lane-dense).
    x_flat = x_nchw.reshape(N, C, HW).astype(compute_dtype)

    kernel = functools.partial(_residual_conv_kernel, W=W)

    out_flat = pl.pallas_call(
        kernel,
        out_shape=jax.ShapeDtypeStruct((N, C, HW), jnp.float32),
        grid_spec=pltpu.PrefetchScalarGridSpec(
            num_scalar_prefetch=0,
            grid=(N,),
            in_specs=[
                pl.BlockSpec((1, C, HW), lambda n: (n, 0, 0)),
                pl.BlockSpec((9, C, C), lambda n: (0, 0, 0)),
                pl.BlockSpec((9, C, C), lambda n: (0, 0, 0)),
                pl.BlockSpec((C, 1), lambda n: (0, 0)),
                pl.BlockSpec((C, 1), lambda n: (0, 0)),
                pl.BlockSpec((4, 1, HW), lambda n: (0, 0, 0)),
            ],
            out_specs=pl.BlockSpec((1, C, HW), lambda n: (n, 0, 0)),
        ),
        compiler_params=pltpu.CompilerParams(
            dimension_semantics=("parallel",),
            # Explicit VMEM budget (stays well under v7x's 64 MiB physical).
            vmem_limit_bytes=32 * 1024 * 1024),
    )(x_flat, w1, w2, b1, b2, mask_arr)

    return out_flat.reshape(N, C, H, W)


def _reference(x, w1, w2, g1, be1, m1, v1, g2, be2, m2, v2, eps=1e-5):
    """Pure-JAX reference (NCHW, eval-mode BN), mirrors the PyTorch forward."""
    def conv(x, w):
        return lax.conv_general_dilated(
            x, w, window_strides=(1, 1), padding=((1, 1), (1, 1)),
            dimension_numbers=("NCHW", "OIHW", "NCHW"))

    def bn(x, g, b, m, v):
        g = g.reshape(1, -1, 1, 1); b = b.reshape(1, -1, 1, 1)
        m = m.reshape(1, -1, 1, 1); v = v.reshape(1, -1, 1, 1)
        return (x - m) / jnp.sqrt(v + eps) * g + b

    out = jax.nn.relu(bn(conv(x, w1), g1, be1, m1, v1))
    out = bn(conv(out, w2), g2, be2, m2, v2)
    return jax.nn.relu(out + x)


if __name__ == "__main__":
    key = jax.random.PRNGKey(0)
    N, C, H, W = 2, 4, 16, 16
    ks = jax.random.split(key, 12)

    x = jax.random.normal(ks[0], (N, C, H, W), jnp.float32)
    w1 = jax.random.normal(ks[1], (C, C, 3, 3), jnp.float32) * 0.1
    w2 = jax.random.normal(ks[2], (C, C, 3, 3), jnp.float32) * 0.1
    g1 = jax.random.normal(ks[3], (C,), jnp.float32) * 0.1 + 1.0
    be1 = jax.random.normal(ks[4], (C,), jnp.float32) * 0.1
    m1 = jax.random.normal(ks[5], (C,), jnp.float32) * 0.1
    v1 = jnp.abs(jax.random.normal(ks[6], (C,), jnp.float32)) * 0.1 + 0.9
    g2 = jax.random.normal(ks[7], (C,), jnp.float32) * 0.1 + 1.0
    be2 = jax.random.normal(ks[8], (C,), jnp.float32) * 0.1
    m2 = jax.random.normal(ks[9], (C,), jnp.float32) * 0.1
    v2 = jnp.abs(jax.random.normal(ks[10], (C,), jnp.float32)) * 0.1 + 0.9

    args = (x, w1, w2, g1, be1, m1, v1, g2, be2, m2, v2)
    ref = _reference(*args)

    # f32 parity path: verifies the conv/BN-fold/mask/roll logic exactly.
    out_f32 = jax.block_until_ready(
        residual_conv(*args, compute_dtype=jnp.float32))
    assert out_f32.shape == (N, C, H, W)
    assert jnp.allclose(out_f32, ref, atol=1e-4, rtol=1e-4), "f32 mismatch"

    # Performance path: bf16 matmuls with f32 accumulation (looser tolerance
    # because inputs/weights/intermediates are rounded to bf16).
    out_bf16 = jax.block_until_ready(
        residual_conv(*args, compute_dtype=jnp.bfloat16))
    assert out_bf16.shape == (N, C, H, W)
    assert jnp.allclose(out_bf16, ref, atol=5e-2, rtol=5e-2), "bf16 mismatch"

    print("KERNEL_OK")
</pallas_src>

<mosaic_0001>
module attributes {stable_mosaic.version = 11 : i64} {
  func.func @_residual_conv_kernel(%arg0: i32, %arg1: memref<1x4x256xf32, #tpu.memory_space<vmem>>, %arg2: memref<9x4x4xf32, #tpu.memory_space<vmem>>, %arg3: memref<9x4x4xf32, #tpu.memory_space<vmem>>, %arg4: memref<4x1xf32, #tpu.memory_space<vmem>>, %arg5: memref<4x1xf32, #tpu.memory_space<vmem>>, %arg6: memref<4x1x256xf32, #tpu.memory_space<vmem>>, %arg7: memref<1x4x256xf32, #tpu.memory_space<vmem>>) attributes {dimension_semantics = [#tpu.dimension_semantics<parallel>], iteration_bounds = array<i64: 2>, scalar_prefetch = 0 : i64, scratch_operands = 0 : i64, tpu.core_type = #tpu.core_type<tc>, window_params = [{transform_indices = @transform_0, window_bounds = array<i64: 1, 4, 256>}, {pipeline_mode = #tpu.pipeline_mode<synchronous>, transform_indices = @transform_1, window_bounds = array<i64: 9, 4, 4>}, {pipeline_mode = #tpu.pipeline_mode<synchronous>, transform_indices = @transform_2, window_bounds = array<i64: 9, 4, 4>}, {pipeline_mode = #tpu.pipeline_mode<synchronous>, transform_indices = @transform_3, window_bounds = array<i64: 4, 1>}, {pipeline_mode = #tpu.pipeline_mode<synchronous>, transform_indices = @transform_4, window_bounds = array<i64: 4, 1>}, {pipeline_mode = #tpu.pipeline_mode<synchronous>, transform_indices = @transform_5, window_bounds = array<i64: 4, 1, 256>}, {transform_indices = @transform_6, window_bounds = array<i64: 1, 4, 256>}]} {
    %c0 = arith.constant 0 : index
    %c0_0 = arith.constant 0 : index
    %c0_1 = arith.constant 0 : index
    %0 = vector.load %arg1[%c0, %c0_0, %c0_1] : memref<1x4x256xf32, #tpu.memory_space<vmem>>, vector<1x4x256xf32>
    %1 = vector.shape_cast %0 : vector<1x4x256xf32> to vector<4x256xf32>
    %c0_2 = arith.constant 0 : index
    %c0_3 = arith.constant 0 : index
    %c0_4 = arith.constant 0 : index
    %2 = vector.load %arg6[%c0_2, %c0_3, %c0_4] : memref<4x1x256xf32, #tpu.memory_space<vmem>>, vector<1x1x256xf32>
    %3 = vector.shape_cast %2 : vector<1x1x256xf32> to vector<1x256xf32>
    %c1 = arith.constant 1 : index
    %c0_5 = arith.constant 0 : index
    %c0_6 = arith.constant 0 : index
    %4 = vector.load %arg6[%c1, %c0_5, %c0_6] : memref<4x1x256xf32, #tpu.memory_space<vmem>>, vector<1x1x256xf32>
    %5 = vector.shape_cast %4 : vector<1x1x256xf32> to vector<1x256xf32>
    %c2 = arith.constant 2 : index
    %c0_7 = arith.constant 0 : index
    %c0_8 = arith.constant 0 : index
    %6 = vector.load %arg6[%c2, %c0_7, %c0_8] : memref<4x1x256xf32, #tpu.memory_space<vmem>>, vector<1x1x256xf32>
    %7 = vector.shape_cast %6 : vector<1x1x256xf32> to vector<1x256xf32>
    %c3 = arith.constant 3 : index
    %c0_9 = arith.constant 0 : index
    %c0_10 = arith.constant 0 : index
    %8 = vector.load %arg6[%c3, %c0_9, %c0_10] : memref<4x1x256xf32, #tpu.memory_space<vmem>>, vector<1x1x256xf32>
    %9 = vector.shape_cast %8 : vector<1x1x256xf32> to vector<1x256xf32>
    %c0_11 = arith.constant 0 : index
    %c0_12 = arith.constant 0 : index
    %10 = vector.load %arg4[%c0_11, %c0_12] : memref<4x1xf32, #tpu.memory_space<vmem>>, vector<4x1xf32>
    %11 = vector.shape_cast %10 : vector<4x1xf32> to vector<4x1xf32>
    %12 = vector.broadcast %11 : vector<4x1xf32> to vector<4x256xf32>
    %c16_i32 = arith.constant 16 : i32
    %13 = tpu.dynamic_rotate %1 by %c16_i32 dim 1 : vector<4x256xf32>, i32 -> vector<4x256xf32>
    %14 = vector.broadcast %3 : vector<1x256xf32> to vector<4x256xf32>
    %15 = arith.mulf %13, %14 : vector<4x256xf32>
    %c240_i32 = arith.constant 240 : i32
    %16 = tpu.dynamic_rotate %1 by %c240_i32 dim 1 : vector<4x256xf32>, i32 -> vector<4x256xf32>
    %17 = vector.broadcast %5 : vector<1x256xf32> to vector<4x256xf32>
    %18 = arith.mulf %16, %17 : vector<4x256xf32>
    %c1_i32 = arith.constant 1 : i32
    %19 = tpu.dynamic_rotate %15 by %c1_i32 dim 1 : vector<4x256xf32>, i32 -> vector<4x256xf32>
    %20 = vector.broadcast %7 : vector<1x256xf32> to vector<4x256xf32>
    %21 = arith.mulf %19, %20 : vector<4x256xf32>
    %c0_13 = arith.constant 0 : index
    %c0_14 = arith.constant 0 : index
    %c0_15 = arith.constant 0 : index
    %22 = vector.load %arg2[%c0_13, %c0_14, %c0_15] : memref<9x4x4xf32, #tpu.memory_space<vmem>>, vector<1x4x4xf32>
    %23 = vector.shape_cast %22 : vector<1x4x4xf32> to vector<4x4xf32>
    %cst = arith.constant dense<0.000000e+00> : vector<4x256xf32>
    %24 = tpu.matmul %23, %21, %cst {dimension_numbers = #tpu.dot_dimension_numbers<[1], [0], [0], [1], [0, 0, 1, 1], [], []>} : vector<4x4xf32>, vector<4x256xf32>, vector<4x256xf32> -> vector<4x256xf32>
    %25 = arith.addf %12, %24 : vector<4x256xf32>
    %c1_16 = arith.constant 1 : index
    %c0_17 = arith.constant 0 : index
    %c0_18 = arith.constant 0 : index
    %26 = vector.load %arg2[%c1_16, %c0_17, %c0_18] : memref<9x4x4xf32, #tpu.memory_space<vmem>>, vector<1x4x4xf32>
    %27 = vector.shape_cast %26 : vector<1x4x4xf32> to vector<4x4xf32>
    %cst_19 = arith.constant dense<0.000000e+00> : vector<4x256xf32>
    %28 = tpu.matmul %27, %15, %cst_19 {dimension_numbers = #tpu.dot_dimension_numbers<[1], [0], [0], [1], [0, 0, 1, 1], [], []>} : vector<4x4xf32>, vector<4x256xf32>, vector<4x256xf32> -> vector<4x256xf32>
    %29 = arith.addf %25, %28 : vector<4x256xf32>
    %c255_i32 = arith.constant 255 : i32
    %30 = tpu.dynamic_rotate %15 by %c255_i32 dim 1 : vector<4x256xf32>, i32 -> vector<4x256xf32>
    %31 = vector.broadcast %9 : vector<1x256xf32> to vector<4x256xf32>
    %32 = arith.mulf %30, %31 : vector<4x256xf32>
    %c2_20 = arith.constant 2 : index
    %c0_21 = arith.constant 0 : index
    %c0_22 = arith.constant 0 : index
    %33 = vector.load %arg2[%c2_20, %c0_21, %c0_22] : memref<9x4x4xf32, #tpu.memory_space<vmem>>, vector<1x4x4xf32>
    %34 = vector.shape_cast %33 : vector<1x4x4xf32> to vector<4x4xf32>
    %cst_23 = arith.constant dense<0.000000e+00> : vector<4x256xf32>
    %35 = tpu.matmul %34, %32, %cst_23 {dimension_numbers = #tpu.dot_dimension_numbers<[1], [0], [0], [1], [0, 0, 1, 1], [], []>} : vector<4x4xf32>, vector<4x256xf32>, vector<4x256xf32> -> vector<4x256xf32>
    %36 = arith.addf %29, %35 : vector<4x256xf32>
    %c1_i32_24 = arith.constant 1 : i32
    %37 = tpu.dynamic_rotate %1 by %c1_i32_24 dim 1 : vector<4x256xf32>, i32 -> vector<4x256xf32>
    %38 = vector.broadcast %7 : vector<1x256xf32> to vector<4x256xf32>
    %39 = arith.mulf %37, %38 : vector<4x256xf32>
    %c3_25 = arith.constant 3 : index
    %c0_26 = arith.constant 0 : index
    %c0_27 = arith.constant 0 : index
    %40 = vector.load %arg2[%c3_25, %c0_26, %c0_27] : memref<9x4x4xf32, #tpu.memory_space<vmem>>, vector<1x4x4xf32>
    %41 = vector.shape_cast %40 : vector<1x4x4xf32> to vector<4x4xf32>
    %cst_28 = arith.constant dense<0.000000e+00> : vector<4x256xf32>
    %42 = tpu.matmul %41, %39, %cst_28 {dimension_numbers = #tpu.dot_dimension_numbers<[1], [0], [0], [1], [0, 0, 1, 1], [], []>} : vector<4x4xf32>, vector<4x256xf32>, vector<4x256xf32> -> vector<4x256xf32>
    %43 = arith.addf %36, %42 : vector<4x256xf32>
    %c4 = arith.constant 4 : index
    %c0_29 = arith.constant 0 : index
    %c0_30 = arith.constant 0 : index
    %44 = vector.load %arg2[%c4, %c0_29, %c0_30] : memref<9x4x4xf32, #tpu.memory_space<vmem>>, vector<1x4x4xf32>
    %45 = vector.shape_cast %44 : vector<1x4x4xf32> to vector<4x4xf32>
    %cst_31 = arith.constant dense<0.000000e+00> : vector<4x256xf32>
    %46 = tpu.matmul %45, %1, %cst_31 {dimension_numbers = #tpu.dot_dimension_numbers<[1], [0], [0], [1], [0, 0, 1, 1], [], []>} : vector<4x4xf32>, vector<4x256xf32>, vector<4x256xf32> -> vector<4x256xf32>
    %47 = arith.addf %43, %46 : vector<4x256xf32>
    %c255_i32_32 = arith.constant 255 : i32
    %48 = tpu.dynamic_rotate %1 by %c255_i32_32 dim 1 : vector<4x256xf32>, i32 -> vector<4x256xf32>
    %49 = vector.broadcast %9 : vector<1x256xf32> to vector<4x256xf32>
    %50 = arith.mulf %48, %49 : vector<4x256xf32>
    %c5 = arith.constant 5 : index
    %c0_33 = arith.constant 0 : index
    %c0_34 = arith.constant 0 : index
    %51 = vector.load %arg2[%c5, %c0_33, %c0_34] : memref<9x4x4xf32, #tpu.memory_space<vmem>>, vector<1x4x4xf32>
    %52 = vector.shape_cast %51 : vector<1x4x4xf32> to vector<4x4xf32>
    %cst_35 = arith.constant dense<0.000000e+00> : vector<4x256xf32>
    %53 = tpu.matmul %52, %50, %cst_35 {dimension_numbers = #tpu.dot_dimension_numbers<[1], [0], [0], [1], [0, 0, 1, 1], [], []>} : vector<4x4xf32>, vector<4x256xf32>, vector<4x256xf32> -> vector<4x256xf32>
    %54 = arith.addf %47, %53 : vector<4x256xf32>
    %c1_i32_36 = arith.constant 1 : i32
    %55 = tpu.dynamic_rotate %18 by %c1_i32_36 dim 1 : vector<4x256xf32>, i32 -> vector<4x256xf32>
    %56 = vector.broadcast %7 : vector<1x256xf32> to vector<4x256xf32>
    %57 = arith.mulf %55, %56 : vector<4x256xf32>
    %c6 = arith.constant 6 : index
    %c0_37 = arith.constant 0 : index
    %c0_38 = arith.constant 0 : index
    %58 = vector.load %arg2[%c6, %c0_37, %c0_38] : memref<9x4x4xf32, #tpu.memory_space<vmem>>, vector<1x4x4xf32>
    %59 = vector.shape_cast %58 : vector<1x4x4xf32> to vector<4x4xf32>
    %cst_39 = arith.constant dense<0.000000e+00> : vector<4x256xf32>
    %60 = tpu.matmul %59, %57, %cst_39 {dimension_numbers = #tpu.dot_dimension_numbers<[1], [0], [0], [1], [0, 0, 1, 1], [], []>} : vector<4x4xf32>, vector<4x256xf32>, vector<4x256xf32> -> vector<4x256xf32>
    %61 = arith.addf %54, %60 : vector<4x256xf32>
    %c7 = arith.constant 7 : index
    %c0_40 = arith.constant 0 : index
    %c0_41 = arith.constant 0 : index
    %62 = vector.load %arg2[%c7, %c0_40, %c0_41] : memref<9x4x4xf32, #tpu.memory_space<vmem>>, vector<1x4x4xf32>
    %63 = vector.shape_cast %62 : vector<1x4x4xf32> to vector<4x4xf32>
    %cst_42 = arith.constant dense<0.000000e+00> : vector<4x256xf32>
    %64 = tpu.matmul %63, %18, %cst_42 {dimension_numbers = #tpu.dot_dimension_numbers<[1], [0], [0], [1], [0, 0, 1, 1], [], []>} : vector<4x4xf32>, vector<4x256xf32>, vector<4x256xf32> -> vector<4x256xf32>
    %65 = arith.addf %61, %64 : vector<4x256xf32>
    %c255_i32_43 = arith.constant 255 : i32
    %66 = tpu.dynamic_rotate %18 by %c255_i32_43 dim 1 : vector<4x256xf32>, i32 -> vector<4x256xf32>
    %67 = vector.broadcast %9 : vector<1x256xf32> to vector<4x256xf32>
    %68 = arith.mulf %66, %67 : vector<4x256xf32>
    %c8 = arith.constant 8 : index
    %c0_44 = arith.constant 0 : index
    %c0_45 = arith.constant 0 : index
    %69 = vector.load %arg2[%c8, %c0_44, %c0_45] : memref<9x4x4xf32, #tpu.memory_space<vmem>>, vector<1x4x4xf32>
    %70 = vector.shape_cast %69 : vector<1x4x4xf32> to vector<4x4xf32>
    %cst_46 = arith.constant dense<0.000000e+00> : vector<4x256xf32>
    %71 = tpu.matmul %70, %68, %cst_46 {dimension_numbers = #tpu.dot_dimension_numbers<[1], [0], [0], [1], [0, 0, 1, 1], [], []>} : vector<4x4xf32>, vector<4x256xf32>, vector<4x256xf32> -> vector<4x256xf32>
    %72 = arith.addf %65, %71 : vector<4x256xf32>
    %cst_47 = arith.constant 0.000000e+00 : f32
    %73 = vector.broadcast %cst_47 : f32 to vector<4x256xf32>
    %74 = arith.maximumf %72, %73 : vector<4x256xf32>
    %c0_48 = arith.constant 0 : index
    %c0_49 = arith.constant 0 : index
    %75 = vector.load %arg5[%c0_48, %c0_49] : memref<4x1xf32, #tpu.memory_space<vmem>>, vector<4x1xf32>
    %76 = vector.shape_cast %75 : vector<4x1xf32> to vector<4x1xf32>
    %77 = vector.broadcast %76 : vector<4x1xf32> to vector<4x256xf32>
    %c16_i32_50 = arith.constant 16 : i32
    %78 = tpu.dynamic_rotate %74 by %c16_i32_50 dim 1 : vector<4x256xf32>, i32 -> vector<4x256xf32>
    %79 = vector.broadcast %3 : vector<1x256xf32> to vector<4x256xf32>
    %80 = arith.mulf %78, %79 : vector<4x256xf32>
    %c240_i32_51 = arith.constant 240 : i32
    %81 = tpu.dynamic_rotate %74 by %c240_i32_51 dim 1 : vector<4x256xf32>, i32 -> vector<4x256xf32>
    %82 = vector.broadcast %5 : vector<1x256xf32> to vector<4x256xf32>
    %83 = arith.mulf %81, %82 : vector<4x256xf32>
    %c1_i32_52 = arith.constant 1 : i32
    %84 = tpu.dynamic_rotate %80 by %c1_i32_52 dim 1 : vector<4x256xf32>, i32 -> vector<4x256xf32>
    %85 = vector.broadcast %7 : vector<1x256xf32> to vector<4x256xf32>
    %86 = arith.mulf %84, %85 : vector<4x256xf32>
    %c0_53 = arith.constant 0 : index
    %c0_54 = arith.constant 0 : index
    %c0_55 = arith.constant 0 : index
    %87 = vector.load %arg3[%c0_53, %c0_54, %c0_55] : memref<9x4x4xf32, #tpu.memory_space<vmem>>, vector<1x4x4xf32>
    %88 = vector.shape_cast %87 : vector<1x4x4xf32> to vector<4x4xf32>
    %cst_56 = arith.constant dense<0.000000e+00> : vector<4x256xf32>
    %89 = tpu.matmul %88, %86, %cst_56 {dimension_numbers = #tpu.dot_dimension_numbers<[1], [0], [0], [1], [0, 0, 1, 1], [], []>} : vector<4x4xf32>, vector<4x256xf32>, vector<4x256xf32> -> vector<4x256xf32>
    %90 = arith.addf %77, %89 : vector<4x256xf32>
    %c1_57 = arith.constant 1 : index
    %c0_58 = arith.constant 0 : index
    %c0_59 = arith.constant 0 : index
    %91 = vector.load %arg3[%c1_57, %c0_58, %c0_59] : memref<9x4x4xf32, #tpu.memory_space<vmem>>, vector<1x4x4xf32>
    %92 = vector.shape_cast %91 : vector<1x4x4xf32> to vector<4x4xf32>
    %cst_60 = arith.constant dense<0.000000e+00> : vector<4x256xf32>
    %93 = tpu.matmul %92, %80, %cst_60 {dimension_numbers = #tpu.dot_dimension_numbers<[1], [0], [0], [1], [0, 0, 1, 1], [], []>} : vector<4x4xf32>, vector<4x256xf32>, vector<4x256xf32> -> vector<4x256xf32>
    %94 = arith.addf %90, %93 : vector<4x256xf32>
    %c255_i32_61 = arith.constant 255 : i32
    %95 = tpu.dynamic_rotate %80 by %c255_i32_61 dim 1 : vector<4x256xf32>, i32 -> vector<4x256xf32>
    %96 = vector.broadcast %9 : vector<1x256xf32> to vector<4x256xf32>
    %97 = arith.mulf %95, %96 : vector<4x256xf32>
    %c2_62 = arith.constant 2 : index
    %c0_63 = arith.constant 0 : index
    %c0_64 = arith.constant 0 : index
    %98 = vector.load %arg3[%c2_62, %c0_63, %c0_64] : memref<9x4x4xf32, #tpu.memory_space<vmem>>, vector<1x4x4xf32>
    %99 = vector.shape_cast %98 : vector<1x4x4xf32> to vector<4x4xf32>
    %cst_65 = arith.constant dense<0.000000e+00> : vector<4x256xf32>
    %100 = tpu.matmul %99, %97, %cst_65 {dimension_numbers = #tpu.dot_dimension_numbers<[1], [0], [0], [1], [0, 0, 1, 1], [], []>} : vector<4x4xf32>, vector<4x256xf32>, vector<4x256xf32> -> vector<4x256xf32>
    %101 = arith.addf %94, %100 : vector<4x256xf32>
    %c1_i32_66 = arith.constant 1 : i32
    %102 = tpu.dynamic_rotate %74 by %c1_i32_66 dim 1 : vector<4x256xf32>, i32 -> vector<4x256xf32>
    %103 = vector.broadcast %7 : vector<1x256xf32> to vector<4x256xf32>
    %104 = arith.mulf %102, %103 : vector<4x256xf32>
    %c3_67 = arith.constant 3 : index
    %c0_68 = arith.constant 0 : index
    %c0_69 = arith.constant 0 : index
    %105 = vector.load %arg3[%c3_67, %c0_68, %c0_69] : memref<9x4x4xf32, #tpu.memory_space<vmem>>, vector<1x4x4xf32>
    %106 = vector.shape_cast %105 : vector<1x4x4xf32> to vector<4x4xf32>
    %cst_70 = arith.constant dense<0.000000e+00> : vector<4x256xf32>
    %107 = tpu.matmul %106, %104, %cst_70 {dimension_numbers = #tpu.dot_dimension_numbers<[1], [0], [0], [1], [0, 0, 1, 1], [], []>} : vector<4x4xf32>, vector<4x256xf32>, vector<4x256xf32> -> vector<4x256xf32>
    %108 = arith.addf %101, %107 : vector<4x256xf32>
    %c4_71 = arith.constant 4 : index
    %c0_72 = arith.constant 0 : index
    %c0_73 = arith.constant 0 : index
    %109 = vector.load %arg3[%c4_71, %c0_72, %c0_73] : memref<9x4x4xf32, #tpu.memory_space<vmem>>, vector<1x4x4xf32>
    %110 = vector.shape_cast %109 : vector<1x4x4xf32> to vector<4x4xf32>
    %cst_74 = arith.constant dense<0.000000e+00> : vector<4x256xf32>
    %111 = tpu.matmul %110, %74, %cst_74 {dimension_numbers = #tpu.dot_dimension_numbers<[1], [0], [0], [1], [0, 0, 1, 1], [], []>} : vector<4x4xf32>, vector<4x256xf32>, vector<4x256xf32> -> vector<4x256xf32>
    %112 = arith.addf %108, %111 : vector<4x256xf32>
    %c255_i32_75 = arith.constant 255 : i32
    %113 = tpu.dynamic_rotate %74 by %c255_i32_75 dim 1 : vector<4x256xf32>, i32 -> vector<4x256xf32>
    %114 = vector.broadcast %9 : vector<1x256xf32> to vector<4x256xf32>
    %115 = arith.mulf %113, %114 : vector<4x256xf32>
    %c5_76 = arith.constant 5 : index
    %c0_77 = arith.constant 0 : index
    %c0_78 = arith.constant 0 : index
    %116 = vector.load %arg3[%c5_76, %c0_77, %c0_78] : memref<9x4x4xf32, #tpu.memory_space<vmem>>, vector<1x4x4xf32>
    %117 = vector.shape_cast %116 : vector<1x4x4xf32> to vector<4x4xf32>
    %cst_79 = arith.constant dense<0.000000e+00> : vector<4x256xf32>
    %118 = tpu.matmul %117, %115, %cst_79 {dimension_numbers = #tpu.dot_dimension_numbers<[1], [0], [0], [1], [0, 0, 1, 1], [], []>} : vector<4x4xf32>, vector<4x256xf32>, vector<4x256xf32> -> vector<4x256xf32>
    %119 = arith.addf %112, %118 : vector<4x256xf32>
    %c1_i32_80 = arith.constant 1 : i32
    %120 = tpu.dynamic_rotate %83 by %c1_i32_80 dim 1 : vector<4x256xf32>, i32 -> vector<4x256xf32>
    %121 = vector.broadcast %7 : vector<1x256xf32> to vector<4x256xf32>
    %122 = arith.mulf %120, %121 : vector<4x256xf32>
    %c6_81 = arith.constant 6 : index
    %c0_82 = arith.constant 0 : index
    %c0_83 = arith.constant 0 : index
    %123 = vector.load %arg3[%c6_81, %c0_82, %c0_83] : memref<9x4x4xf32, #tpu.memory_space<vmem>>, vector<1x4x4xf32>
    %124 = vector.shape_cast %123 : vector<1x4x4xf32> to vector<4x4xf32>
    %cst_84 = arith.constant dense<0.000000e+00> : vector<4x256xf32>
    %125 = tpu.matmul %124, %122, %cst_84 {dimension_numbers = #tpu.dot_dimension_numbers<[1], [0], [0], [1], [0, 0, 1, 1], [], []>} : vector<4x4xf32>, vector<4x256xf32>, vector<4x256xf32> -> vector<4x256xf32>
    %126 = arith.addf %119, %125 : vector<4x256xf32>
    %c7_85 = arith.constant 7 : index
    %c0_86 = arith.constant 0 : index
    %c0_87 = arith.constant 0 : index
    %127 = vector.load %arg3[%c7_85, %c0_86, %c0_87] : memref<9x4x4xf32, #tpu.memory_space<vmem>>, vector<1x4x4xf32>
    %128 = vector.shape_cast %127 : vector<1x4x4xf32> to vector<4x4xf32>
    %cst_88 = arith.constant dense<0.000000e+00> : vector<4x256xf32>
    %129 = tpu.matmul %128, %83, %cst_88 {dimension_numbers = #tpu.dot_dimension_numbers<[1], [0], [0], [1], [0, 0, 1, 1], [], []>} : vector<4x4xf32>, vector<4x256xf32>, vector<4x256xf32> -> vector<4x256xf32>
    %130 = arith.addf %126, %129 : vector<4x256xf32>
    %c255_i32_89 = arith.constant 255 : i32
    %131 = tpu.dynamic_rotate %83 by %c255_i32_89 dim 1 : vector<4x256xf32>, i32 -> vector<4x256xf32>
    %132 = vector.broadcast %9 : vector<1x256xf32> to vector<4x256xf32>
    %133 = arith.mulf %131, %132 : vector<4x256xf32>
    %c8_90 = arith.constant 8 : index
    %c0_91 = arith.constant 0 : index
    %c0_92 = arith.constant 0 : index
    %134 = vector.load %arg3[%c8_90, %c0_91, %c0_92] : memref<9x4x4xf32, #tpu.memory_space<vmem>>, vector<1x4x4xf32>
    %135 = vector.shape_cast %134 : vector<1x4x4xf32> to vector<4x4xf32>
    %cst_93 = arith.constant dense<0.000000e+00> : vector<4x256xf32>
    %136 = tpu.matmul %135, %133, %cst_93 {dimension_numbers = #tpu.dot_dimension_numbers<[1], [0], [0], [1], [0, 0, 1, 1], [], []>} : vector<4x4xf32>, vector<4x256xf32>, vector<4x256xf32> -> vector<4x256xf32>
    %137 = arith.addf %130, %136 : vector<4x256xf32>
    %138 = arith.addf %137, %1 : vector<4x256xf32>
    %cst_94 = arith.constant 0.000000e+00 : f32
    %139 = vector.broadcast %cst_94 : f32 to vector<4x256xf32>
    %140 = arith.maximumf %138, %139 : vector<4x256xf32>
    %c0_95 = arith.constant 0 : index
    %c0_96 = arith.constant 0 : index
    %c0_97 = arith.constant 0 : index
    %141 = vector.load %arg7[%c0_95, %c0_96, %c0_97] : memref<1x4x256xf32, #tpu.memory_space<vmem>>, vector<1x4x256xf32>
    %142 = vector.shape_cast %141 : vector<1x4x256xf32> to vector<4x256xf32>
    %143 = vector.shape_cast %140 : vector<4x256xf32> to vector<1x4x256xf32>
    tpu.vector_store %arg7[%c0_95, %c0_96, %c0_97], %143 {strides = array<i32>} : memref<1x4x256xf32, #tpu.memory_space<vmem>>, vector<1x4x256xf32>,
    return
  }
  func.func @transform_0(%arg0: i32) -> (i32, i32, i32) {
    %c0_i32 = arith.constant 0 : i32
    %c0_i32_0 = arith.constant 0 : i32
    %c0_i32_1 = arith.constant 0 : i32
    return %arg0, %c0_i32, %c0_i32_0 : i32, i32, i32
  }
  func.func @transform_1(%arg0: i32) -> (i32, i32, i32) {
    %c0_i32 = arith.constant 0 : i32
    %c0_i32_0 = arith.constant 0 : i32
    %c0_i32_1 = arith.constant 0 : i32
    %c0_i32_2 = arith.constant 0 : i32
    return %c0_i32, %c0_i32_0, %c0_i32_1 : i32, i32, i32
  }
  func.func @transform_2(%arg0: i32) -> (i32, i32, i32) {
    %c0_i32 = arith.constant 0 : i32
    %c0_i32_0 = arith.constant 0 : i32
    %c0_i32_1 = arith.constant 0 : i32
    %c0_i32_2 = arith.constant 0 : i32
    return %c0_i32, %c0_i32_0, %c0_i32_1 : i32, i32, i32
  }
  func.func @transform_3(%arg0: i32) -> (i32, i32) {
    %c0_i32 = arith.constant 0 : i32
    %c0_i32_0 = arith.constant 0 : i32
    %c0_i32_1 = arith.constant 0 : i32
    return %c0_i32, %c0_i32_0 : i32, i32
  }
  func.func @transform_4(%arg0: i32) -> (i32, i32) {
    %c0_i32 = arith.constant 0 : i32
    %c0_i32_0 = arith.constant 0 : i32
    %c0_i32_1 = arith.constant 0 : i32
    return %c0_i32, %c0_i32_0 : i32, i32
  }
  func.func @transform_5(%arg0: i32) -> (i32, i32, i32) {
    %c0_i32 = arith.constant 0 : i32
    %c0_i32_0 = arith.constant 0 : i32
    %c0_i32_1 = arith.constant 0 : i32
    %c0_i32_2 = arith.constant 0 : i32
    return %c0_i32, %c0_i32_0, %c0_i32_1 : i32, i32, i32
  }
  func.func @transform_6(%arg0: i32) -> (i32, i32, i32) {
    %c0_i32 = arith.constant 0 : i32
    %c0_i32_0 = arith.constant 0 : i32
    %c0_i32_1 = arith.constant 0 : i32
    return %arg0, %c0_i32, %c0_i32_0 : i32, i32, i32
  }
}

</mosaic_0001>

<llo_original>
// kernel: tpu_custom_call.1
$region0: #{tpu_custom_call.1}
  #allocation0 [shape = 'u32[]', space=smem, size = 0x4, offset = 0x4, fixed_abs, tag = 'smem constant byte address 0x4 - core index']
  #allocation1 [shape = 'u32[144,128]{1,0:T(1,128)}', space=vmem, size = 0x12000, scoped, tag = 'internal scratch']
  %s0 = inlined_call_operand.vmem [shape: f32[2,4,256], index: 0, kind: input, shape index: {}]
  %s1 = inlined_call_operand.vmem [shape: f32[9,4,4], index: 1, kind: input, shape index: {}]
  %s2 = inlined_call_operand.vmem [shape: f32[9,4,4], index: 2, kind: input, shape index: {}]
  %s3 = inlined_call_operand.vmem [shape: f32[4,1], index: 3, kind: input, shape index: {}]
  %s4 = inlined_call_operand.vmem [shape: f32[4,1], index: 4, kind: input, shape index: {}]
  %s5 = inlined_call_operand.vmem [shape: f32[4,1,256], index: 5, kind: input, shape index: {}]
  %s6 = inlined_call_operand.hbm [shape: f32[2,4,256], index: 6, kind: output, shape index: {}]
  %s7 = sld [smem:[#allocation0]]
  $region57: #{tpu_custom_call.1} parent=0
    _
  %s9 = ssub.s32 1, %s7
  %s10 = scalar_select 0, %s9, %s7
  $region1: #{tpu_custom_call.1} parent=0
    #allocation2 [shape = 'u8[8192]{0}', space=vmem, size = 0x2000, scoped, tag = 'output window, operand 0']
    #allocation3 [shape = 's32[2]{0}', space=sflag, size = 0x8, scoped, tag = 'scoped memory for tpu_custom_call.1']
    %11 = vsyncpa [#allocation3], 0
    %s12 = scalar_lea.sflag [#allocation3], 1
    %13 = vsyncpa %s12, 0
    loop: start=0, step=1, limit=4
    $region2: #{tpu_custom_call.1} parent=1 // loop_pre_header
      _
    $region3: #{tpu_custom_call.1} parent=1 // loop_header
      %s15 = sphi 0, %s19
      %p16 = scmp.ge.s32.totalorder %s15, 4
      %s25 = sphi 0, %s27
      %s28 = sphi 0, %s25
      %s29 = sphi 0, %s28
      %s45 = sphi 0, %s29
      %s49 = sphi 0, %s49
      %s51 = sphi 0, %s49
      %s52 = sphi 0, %s51
      %s66 = sphi 0, %s52
      %s70 = sphi 0, %s70
      %s72 = sphi 0, %s70
      %s73 = sphi 0, %s72
      %s87 = sphi 0, %s73
      %s91 = sphi 0, %s91
      %s93 = sphi 0, %s91
      %s94 = sphi 0, %s93
      %s108 = sphi 0, %s94
      %s112 = sphi 0, %s112
      %s114 = sphi 0, %s112
      %s115 = sphi 0, %s114
      %s129 = sphi 0, %s115
      %s133 = sphi 0, %s133
      %s135 = sphi 0, %s133
      %s136 = sphi 0, %s135
      %s150 = sphi 0, %s136
      %s156 = sphi 0, %s158
      %s159 = sphi 0, %s156
      %s160 = sphi 0, %s159
      %s176 = sphi 0, %s160
    $region4: #{tpu_custom_call.1} parent=1 // loop_header_branch
      %18 = sbr.rel (%p16) target = $region8
    $region5: #{tpu_custom_call.1} parent=1 // loop_body
      %s20 = ssub.s32 %s15, 1
      %s21 = ssub.s32 %s15, 2
      %s22 = sadd.s32 %s15, 1
      %s23 = ssub.s32 %s15, %s22
      %p24 = scmp.eq.s32.totalorder %s23, 0
      %s26 = sadd.s32 %s25, 1
      %s27 = scalar_select %p24, %s25, %s26
      %p30 = pneg %p24
      %p31 = scmp.eq.s32.totalorder %s15, 1
      %p32 = por %p30, %p31
      %p33 = scmp.ne.s32.totalorder %s25, %s28
      %p34 = scmp.eq.s32.totalorder %s15, 0
      %p35 = por %p33, %p34
      %p36 = scmp.ne.s32.totalorder %s25, %s28
      %p37 = scmp.eq.s32.totalorder %s20, 1
      %p38 = por %p36, %p37
      %p39 = scmp.ne.s32.totalorder %s28, %s29
      %p40 = scmp.eq.s32.totalorder %s20, 0
      %p41 = por %p39, %p40
      %p42 = scmp.ne.s32.totalorder %s28, %s29
      %p43 = scmp.eq.s32.totalorder %s21, 1
      %p44 = por %p42, %p43
      %p46 = scmp.ne.s32.totalorder %s29, %s45
      %p47 = scmp.eq.s32.totalorder %s21, 0
      %p48 = por %p46, %p47
      %s50 = sadd.s32 %s49, 1
      %p53 = scmp.eq.s32.totalorder %s15, 1
      %p54 = scmp.ne.s32.totalorder %s49, %s51
      %p55 = scmp.eq.s32.totalorder %s15, 0
      %p56 = por %p54, %p55
      %p57 = scmp.ne.s32.totalorder %s49, %s51
      %p58 = scmp.eq.s32.totalorder %s20, 1
      %p59 = por %p57, %p58
      %p60 = scmp.ne.s32.totalorder %s51, %s52
      %p61 = scmp.eq.s32.totalorder %s20, 0
      %p62 = por %p60, %p61
      %p63 = scmp.ne.s32.totalorder %s51, %s52
      %p64 = scmp.eq.s32.totalorder %s21, 1
      %p65 = por %p63, %p64
      %p67 = scmp.ne.s32.totalorder %s52, %s66
      %p68 = scmp.eq.s32.totalorder %s21, 0
      %p69 = por %p67, %p68
      %s71 = sadd.s32 %s70, 1
      %p74 = scmp.eq.s32.totalorder %s15, 1
      %p75 = scmp.ne.s32.totalorder %s70, %s72
      %p76 = scmp.eq.s32.totalorder %s15, 0
      %p77 = por %p75, %p76
      %p78 = scmp.ne.s32.totalorder %s70, %s72
      %p79 = scmp.eq.s32.totalorder %s20, 1
      %p80 = por %p78, %p79
      %p81 = scmp.ne.s32.totalorder %s72, %s73
      %p82 = scmp.eq.s32.totalorder %s20, 0
      %p83 = por %p81, %p82
      %p84 = scmp.ne.s32.totalorder %s72, %s73
      %p85 = scmp.eq.s32.totalorder %s21, 1
      %p86 = por %p84, %p85
      %p88 = scmp.ne.s32.totalorder %s73, %s87
      %p89 = scmp.eq.s32.totalorder %s21, 0
      %p90 = por %p88, %p89
      %s92 = sadd.s32 %s91, 1
      %p95 = scmp.eq.s32.totalorder %s15, 1
      %p96 = scmp.ne.s32.totalorder %s91, %s93
      %p97 = scmp.eq.s32.totalorder %s15, 0
      %p98 = por %p96, %p97
      %p99 = scmp.ne.s32.totalorder %s91, %s93
      %p100 = scmp.eq.s32.totalorder %s20, 1
      %p101 = por %p99, %p100
      %p102 = scmp.ne.s32.totalorder %s93, %s94
      %p103 = scmp.eq.s32.totalorder %s20, 0
      %p104 = por %p102, %p103
      %p105 = scmp.ne.s32.totalorder %s93, %s94
      %p106 = scmp.eq.s32.totalorder %s21, 1
      %p107 = por %p105, %p106
      %p109 = scmp.ne.s32.totalorder %s94, %s108
      %p110 = scmp.eq.s32.totalorder %s21, 0
      %p111 = por %p109, %p110
      %s113 = sadd.s32 %s112, 1
      %p116 = scmp.eq.s32.totalorder %s15, 1
      %p117 = scmp.ne.s32.totalorder %s112, %s114
      %p118 = scmp.eq.s32.totalorder %s15, 0
      %p119 = por %p117, %p118
      %p120 = scmp.ne.s32.totalorder %s112, %s114
      %p121 = scmp.eq.s32.totalorder %s20, 1
      %p122 = por %p120, %p121
      %p123 = scmp.ne.s32.totalorder %s114, %s115
      %p124 = scmp.eq.s32.totalorder %s20, 0
      %p125 = por %p123, %p124
      %p126 = scmp.ne.s32.totalorder %s114, %s115
      %p127 = scmp.eq.s32.totalorder %s21, 1
      %p128 = por %p126, %p127
      %p130 = scmp.ne.s32.totalorder %s115, %s129
      %p131 = scmp.eq.s32.totalorder %s21, 0
      %p132 = por %p130, %p131
      %s134 = sadd.s32 %s133, 1
      %p137 = scmp.eq.s32.totalorder %s15, 1
      %p138 = scmp.ne.s32.totalorder %s133, %s135
      %p139 = scmp.eq.s32.totalorder %s15, 0
      %p140 = por %p138, %p139
      %p141 = scmp.ne.s32.totalorder %s133, %s135
      %p142 = scmp.eq.s32.totalorder %s20, 1
      %p143 = por %p141, %p142
      %p144 = scmp.ne.s32.totalorder %s135, %s136
      %p145 = scmp.eq.s32.totalorder %s20, 0
      %p146 = por %p144, %p145
      %p147 = scmp.ne.s32.totalorder %s135, %s136
      %p148 = scmp.eq.s32.totalorder %s21, 1
      %p149 = por %p147, %p148
      %p151 = scmp.ne.s32.totalorder %s136, %s150
      %p152 = scmp.eq.s32.totalorder %s21, 0
      %p153 = por %p151, %p152
      %s154 = ssub.s32 %s15, %s22
      %p155 = scmp.eq.s32.totalorder %s154, 0
      %s157 = sadd.s32 %s156, 1
      %s158 = scalar_select %p155, %s156, %s157
      %p161 = pneg %p155
      %p162 = scmp.eq.s32.totalorder %s15, 1
      %p163 = por %p161, %p162
      %p164 = scmp.ne.s32.totalorder %s156, %s159
      %p165 = scmp.eq.s32.totalorder %s15, 0
      %p166 = por %p164, %p165
      %p167 = scmp.ne.s32.totalorder %s156, %s159
      %p168 = scmp.eq.s32.totalorder %s20, 1
      %p169 = por %p167, %p168
      %p170 = scmp.ne.s32.totalorder %s159, %s160
      %p171 = scmp.eq.s32.totalorder %s20, 0
      %p172 = por %p170, %p171
      %p173 = scmp.ne.s32.totalorder %s159, %s160
      %p174 = scmp.eq.s32.totalorder %s21, 1
      %p175 = por %p173, %p174
      %p177 = scmp.ne.s32.totalorder %s160, %s176
      %p178 = scmp.eq.s32.totalorder %s21, 0
      %p179 = por %p177, %p178
      %p180 = scmp.le.s32.totalorder 1, %s15
      %p181 = scmp.lt.s32.totalorder %s15, 3
      %p182 = pnand %p180, %p181
      %p183 = pneg %p182
      // Predicated region
      $region9: #{tpu_custom_call.1} parent=5 // pred_check
        _
      $region10: #{tpu_custom_call.1} parent=5 // pred_check_branch
        %185 = sbr.rel (%p182) target = $region12
      $region11: #{tpu_custom_call.1} parent=5 // pred_region
        %s186 = ssub.s32 %s15, 1
        // Predicated region
        $region13: #{tpu_custom_call.1} parent=11 // pred_check
          %p187 = pneg %p62
        $region14: #{tpu_custom_call.1} parent=11 // pred_check_branch
          %189 = sbr.rel (%p187) target = $region16
        $region15: #{tpu_custom_call.1} parent=11 // pred_region
          _
        $region16: #{tpu_custom_call.1} parent=11 // pred_fallthru
          _
        // Predicated region
        $region17: #{tpu_custom_call.1} parent=11 // pred_check
          %p190 = pneg %p83
        $region18: #{tpu_custom_call.1} parent=11 // pred_check_branch
          %192 = sbr.rel (%p190) target = $region20
        $region19: #{tpu_custom_call.1} parent=11 // pred_region
          _
        $region20: #{tpu_custom_call.1} parent=11 // pred_fallthru
          _
        // Predicated region
        $region21: #{tpu_custom_call.1} parent=11 // pred_check
          %p193 = pneg %p104
        $region22: #{tpu_custom_call.1} parent=11 // pred_check_branch
          %195 = sbr.rel (%p193) target = $region24
        $region23: #{tpu_custom_call.1} parent=11 // pred_region
          _
        $region24: #{tpu_custom_call.1} parent=11 // pred_fallthru
          _
        // Predicated region
        $region25: #{tpu_custom_call.1} parent=11 // pred_check
          %p196 = pneg %p125
        $region26: #{tpu_custom_call.1} parent=11 // pred_check_branch
          %198 = sbr.rel (%p196) target = $region28
        $region27: #{tpu_custom_call.1} parent=11 // pred_region
          _
        $region28: #{tpu_custom_call.1} parent=11 // pred_fallthru
          _
        // Predicated region
        $region29: #{tpu_custom_call.1} parent=11 // pred_check
          %p199 = pneg %p146
        $region30: #{tpu_custom_call.1} parent=11 // pred_check_branch
          %201 = sbr.rel (%p199) target = $region32
        $region31: #{tpu_custom_call.1} parent=11 // pred_region
          _
        $region32: #{tpu_custom_call.1} parent=11 // pred_fallthru
          _
      $region12: #{tpu_custom_call.1} parent=5 // pred_fallthru
        _
      %p202 = scmp.lt.s32.totalorder %s15, 2
      // Predicated region
      $region33: #{tpu_custom_call.1} parent=5 // pred_check
        %p203 = pneg %p202
      $region34: #{tpu_custom_call.1} parent=5 // pred_check_branch
        %205 = sbr.rel (%p203) target = $region36
      $region35: #{tpu_custom_call.1} parent=5 // pred_region
        // Predicated region
        $region37: #{tpu_custom_call.1} parent=35 // pred_check
          %p206 = pneg %p35
        $region38: #{tpu_custom_call.1} parent=35 // pred_check_branch
          %208 = sbr.rel (%p206) target = $region40
        $region39: #{tpu_custom_call.1} parent=35 // pred_region
          %p209 = scmp.lt.s32.totalorder %s15, 1
          %s210 = scalar_select %p209, %s15, 1
          %s211 = smul.addr %s210, 2
          %s212 = smul.addr %s211, 4
          %s213 = scalar_lea.vmem %s0, %s212
        $region40: #{tpu_custom_call.1} parent=35 // pred_fallthru
          _
      $region36: #{tpu_custom_call.1} parent=5 // pred_fallthru
        _
      %p214 = scmp.le.s32.totalorder 1, %s15
      %p215 = scmp.lt.s32.totalorder %s15, 3
      %p216 = pnand %p214, %p215
      %p217 = pneg %p216
      // Predicated region
      $region41: #{tpu_custom_call.1} parent=5 // pred_check
        _
      $region42: #{tpu_custom_call.1} parent=5 // pred_check_branch
        %219 = sbr.rel (%p216) target = $region44
      $region43: #{tpu_custom_call.1} parent=5 // pred_region
        %s220 = ssub.s32 %s15, 1
        %p221 = scmp.lt.s32.totalorder %s20, 1
        %s222 = scalar_select %p221, %s20, 1
        %s223 = smul.addr %s222, 2
        %s224 = smul.addr %s223, 4
        %s225 = scalar_lea.vmem %s0, %s224
        %p226 = pneg %p41
        %p227 = pneg %p38
        %p228 = pneg %p62
        %p229 = pneg %p59
        %p230 = pneg %p83
        %p231 = pneg %p80
        %p232 = pneg %p104
        %p233 = pneg %p101
        %p234 = pneg %p125
        %p235 = pneg %p122
        %p236 = pneg %p146
        %p237 = pneg %p143
        %p238 = pneg %p172
        %p239 = pneg %p169
        %s240 = sand.u32 %s159, 1
        %s241 = scalar_lea.sflag [#allocation3], %s240
        %s242 = sand.u32 %s159, 1
        %s243 = smul.addr %s242, 8
        %s244 = scalar_lea.vmem [#allocation2], %s243
        %p245 = scmp.lt.s32.totalorder %s20, 1
        %s246 = scalar_select %p245, %s20, 1
        %s247 = smul.addr %s246, 2
        %s248 = smul.addr %s247, 4
        %s249 = scalar_lea.vmem %s0, %s248
        %v250 = vld [vmem:[%s249] sm:$0xff]
        %v251 = vld [vmem:[%s5] sm:$0x3]
        %s252 = scalar_lea.vmem %s5, 2
        %v253 = vld [vmem:[%s252] sm:$0x3]
        %s254 = scalar_lea.vmem %s5, 4
        %v255 = vld [vmem:[%s254] sm:$0x3]
        %s256 = scalar_lea.vmem %s5, 6
        %v257 = vld [vmem:[%s256] sm:$0x3]
        %v258 = vld [vmem:[%s3] sm:$0xf]
        %260 = vset.pattern.permute.xlu0 0
        %261 = vperm.xlu0 %260, %v258
        %v262 = vpop.permute.xlu0 %261
        %v265 = vcombine.high %v250, %v250
        %267 = vrot.lane.b32.xlu0 %v250, 16
        %v268 = vpop.permute.xlu0 %267
        %269 = vrot.lane.b32.xlu0 %v265, 16
        %v270 = vpop.permute.xlu0 %269
        %v271 = vlaneseq
        %v272 = vand.u32 %v271, 127
        %vm273 = vcmp.lt.s32.totalorder %v272, 16
        %v274 = vsel %vm273, %v268, %v270
        %v275 = vsel %vm273, %v270, %v268
        %v277 = vlaneseq
        %v278 = vshrl.u32 %v277, 7
        %v279 = vsub.s32 0, %v278
        %v280 = vrot.slane %v251, %v279
        %v281 = vlaneseq
        %v282 = vshrl.u32 %v281, 7
        %v283 = vsub.s32 1, %v282
        %v284 = vrot.slane %v251, %v283
        %v287 = vmul.f32 %v275, %v280
        %v288 = vmul.f32 %v274, %v284
        %289 = vrot.lane.b32.xlu0 %v250, 112
        %v290 = vpop.permute.xlu0 %289
        %291 = vrot.lane.b32.xlu0 %v265, 112
        %v292 = vpop.permute.xlu0 %291
        %vm293 = vcmp.lt.s32.totalorder %v272, 112
        %v294 = vsel %vm293, %v290, %v292
        %v295 = vsel %vm293, %v292, %v290
        %v297 = vlaneseq
        %v298 = vshrl.u32 %v297, 7
        %v299 = vsub.s32 0, %v298
        %v300 = vrot.slane %v253, %v299
        %v301 = vlaneseq
        %v302 = vshrl.u32 %v301, 7
        %v303 = vsub.s32 1, %v302
        %v304 = vrot.slane %v253, %v303
        %v307 = vmul.f32 %v294, %v300
        %v308 = vmul.f32 %v295, %v304
        %309 = vrot.lane.b32.xlu0 %v287, 1
        %v310 = vpop.permute.xlu0 %309
        %311 = vrot.lane.b32.xlu0 %v288, 1
        %v312 = vpop.permute.xlu0 %311
        %vm313 = vcmp.lt.s32.totalorder %v272, 1
        %v314 = vsel %vm313, %v310, %v312
        %v315 = vsel %vm313, %v312, %v310
        %v317 = vlaneseq
        %v318 = vshrl.u32 %v317, 7
        %v319 = vsub.s32 0, %v318
        %v320 = vrot.slane %v255, %v319
        %v321 = vlaneseq
        %v322 = vshrl.u32 %v321, 7
        %v323 = vsub.s32 1, %v322
        %v324 = vrot.slane %v255, %v323
        %v327 = vmul.f32 %v315, %v320
        %v328 = vmul.f32 %v314, %v324
        %v329 = vld [vmem:[%s1] sm:$0xf]
        %vm330 = vcmask 31744
        %v332 = vsel %vm330, %v329, 0
        %vm334 = vcmask 1043456
        %v336 = vsel %vm334, %v327, 0
        %v339 = vsel %vm334, %v328, 0
        %341 = vmatprep.subr.mxu0 0.0
        %342 = vmatpush1.msra.mxu0 0.0
        %343 = vmatprep.subr.mxu0 0.0
        %344 = vmatpush1.msra.mxu0 0.0
        %345 = vmatprep.subr.mxu0 0.0
        %346 = vmatpush1.msra.mxu0 0.0
        %347 = vmatprep.subr.mxu0 0.0
        %348 = vmatpush1.msra.mxu0 0.0
        %349 = vmatprep.subr.mxu0 0.0
        %350 = vmatpush1.msra.mxu0 0.0
        %351 = vmatprep.subr.mxu0 0.0
        %352 = vmatpush1.msra.mxu0 0.0
        %353 = vmatprep.subr.mxu0 0.0
        %354 = vmatpush1.msra.mxu0 0.0
        %355 = vmatprep.subr.mxu0 0.0
        %356 = vmatpush1.msra.mxu0 0.0
        %357 = vmatprep.subr.mxu0 0.0
        %358 = vmatpush1.msra.mxu0 0.0
        %359 = vmatprep.subr.mxu0 0.0
        %360 = vmatpush1.msra.mxu0 0.0
        %361 = vmatprep.subr.mxu0 0.0
        %362 = vmatpush1.msra.mxu0 0.0
        %363 = vmatprep.subr.mxu0 0.0
        %364 = vmatpush1.msra.mxu0 0.0
        %365 = vmatprep.subr.mxu0 0.0
        %366 = vmatpush1.msra.mxu0 0.0
        %367 = vmatprep.subr.mxu0 0.0
        %368 = vmatpush1.msra.mxu0 0.0
        %369 = vmatprep.subr.mxu0 0.0
        %370 = vmatpush1.msra.mxu0 0.0
        %371 = vmatprep.subr.mxu0 %v339
        %372 = vmatpush1.msra.mxu0 %v336
        %373 = vmatprep.subr.mxu0 0.0
        %374 = vmatpush2.msra.mxu0 0.0
        %375 = vmatprep.subr.mxu0 0.0
        %376 = vmatpush2.msra.mxu0 0.0
        %377 = vmatprep.subr.mxu0 0.0
        %378 = vmatpush2.msra.mxu0 0.0
        %379 = vmatprep.subr.mxu0 0.0
        %380 = vmatpush2.msra.mxu0 0.0
        %381 = vmatprep.subr.mxu0 0.0
        %382 = vmatpush2.msra.mxu0 0.0
        %383 = vmatprep.subr.mxu0 0.0
        %384 = vmatpush2.msra.mxu0 0.0
        %385 = vmatprep.subr.mxu0 0.0
        %386 = vmatpush2.msra.mxu0 0.0
        %387 = vmatprep.subr.mxu0 0.0
        %388 = vmatpush2.msra.mxu0 0.0
        %389 = vmatprep.subr.mxu0 0.0
        %390 = vmatpush2.msra.mxu0 0.0
        %391 = vmatprep.subr.mxu0 0.0
        %392 = vmatpush2.msra.mxu0 0.0
        %393 = vmatprep.subr.mxu0 0.0
        %394 = vmatpush2.msra.mxu0 0.0
        %395 = vmatprep.subr.mxu0 0.0
        %396 = vmatpush2.msra.mxu0 0.0
        %397 = vmatprep.subr.mxu0 0.0
        %398 = vmatpush2.msra.mxu0 0.0
        %399 = vmatprep.subr.mxu0 0.0
        %400 = vmatpush2.msra.mxu0 0.0
        %401 = vmatprep.subr.mxu0 0.0
        %402 = vmatpush2.msra.mxu0 0.0
        %403 = vmatprep.subr.mxu0 0.0
        %404 = vmatpush2.msra.mxu0 0.0
        %405 = vmatprep.mubr.f32.mxu0 0.0
        %406 = vmatmul.mubr.f32.gmra.mxu0 %v332
        %v407 = vpop.f32.mrf.mxu0
        %v408 = vadd.f32 0.0, %v407
        %v409 = vpop.f32.mrf.mxu0
        %v410 = vadd.f32 0.0, %v409
        %411 = vdwg.mxu0
        %v412 = vadd.f32 %v262, %v408
        %v413 = vadd.f32 %v262, %v410
        %s414 = scalar_lea.vmem %s1, 4
        %v415 = vld [vmem:[%s414] sm:$0xf]
        %v417 = vsel %vm330, %v415, 0
        %v420 = vsel %vm334, %v287, 0
        %v423 = vsel %vm334, %v288, 0
        %425 = vmatprep.subr.mxu0 0.0
        %426 = vmatpush1.msra.mxu0 0.0
        %427 = vmatprep.subr.mxu0 0.0
        %428 = vmatpush1.msra.mxu0 0.0
        %429 = vmatprep.subr.mxu0 0.0
        %430 = vmatpush1.msra.mxu0 0.0
        %431 = vmatprep.subr.mxu0 0.0
        %432 = vmatpush1.msra.mxu0 0.0
        %433 = vmatprep.subr.mxu0 0.0
        %434 = vmatpush1.msra.mxu0 0.0
        %435 = vmatprep.subr.mxu0 0.0
        %436 = vmatpush1.msra.mxu0 0.0
        %437 = vmatprep.subr.mxu0 0.0
        %438 = vmatpush1.msra.mxu0 0.0
        %439 = vmatprep.subr.mxu0 0.0
        %440 = vmatpush1.msra.mxu0 0.0
        %441 = vmatprep.subr.mxu0 0.0
        %442 = vmatpush1.msra.mxu0 0.0
        %443 = vmatprep.subr.mxu0 0.0
        %444 = vmatpush1.msra.mxu0 0.0
        %445 = vmatprep.subr.mxu0 0.0
        %446 = vmatpush1.msra.mxu0 0.0
        %447 = vmatprep.subr.mxu0 0.0
        %448 = vmatpush1.msra.mxu0 0.0
        %449 = vmatprep.subr.mxu0 0.0
        %450 = vmatpush1.msra.mxu0 0.0
        %451 = vmatprep.subr.mxu0 0.0
        %452 = vmatpush1.msra.mxu0 0.0
        %453 = vmatprep.subr.mxu0 0.0
        %454 = vmatpush1.msra.mxu0 0.0
        %455 = vmatprep.subr.mxu0 %v423
        %456 = vmatpush1.msra.mxu0 %v420
        %457 = vmatprep.subr.mxu0 0.0
        %458 = vmatpush2.msra.mxu0 0.0
        %459 = vmatprep.subr.mxu0 0.0
        %460 = vmatpush2.msra.mxu0 0.0
        %461 = vmatprep.subr.mxu0 0.0
        %462 = vmatpush2.msra.mxu0 0.0
        %463 = vmatprep.subr.mxu0 0.0
        %464 = vmatpush2.msra.mxu0 0.0
        %465 = vmatprep.subr.mxu0 0.0
        %466 = vmatpush2.msra.mxu0 0.0
        %467 = vmatprep.subr.mxu0 0.0
        %468 = vmatpush2.msra.mxu0 0.0
        %469 = vmatprep.subr.mxu0 0.0
        %470 = vmatpush2.msra.mxu0 0.0
        %471 = vmatprep.subr.mxu0 0.0
        %472 = vmatpush2.msra.mxu0 0.0
        %473 = vmatprep.subr.mxu0 0.0
        %474 = vmatpush2.msra.mxu0 0.0
        %475 = vmatprep.subr.mxu0 0.0
        %476 = vmatpush2.msra.mxu0 0.0
        %477 = vmatprep.subr.mxu0 0.0
        %478 = vmatpush2.msra.mxu0 0.0
        %479 = vmatprep.subr.mxu0 0.0
        %480 = vmatpush2.msra.mxu0 0.0
        %481 = vmatprep.subr.mxu0 0.0
        %482 = vmatpush2.msra.mxu0 0.0
        %483 = vmatprep.subr.mxu0 0.0
        %484 = vmatpush2.msra.mxu0 0.0
        %485 = vmatprep.subr.mxu0 0.0
        %486 = vmatpush2.msra.mxu0 0.0
        %487 = vmatprep.subr.mxu0 0.0
        %488 = vmatpush2.msra.mxu0 0.0
        %489 = vmatprep.mubr.f32.mxu0 0.0
        %490 = vmatmul.mubr.f32.gmra.mxu0 %v417
        %v491 = vpop.f32.mrf.mxu0
        %v492 = vadd.f32 0.0, %v491
        %v493 = vpop.f32.mrf.mxu0
        %v494 = vadd.f32 0.0, %v493
        %495 = vdwg.mxu0
        %v496 = vadd.f32 %v412, %v492
        %v497 = vadd.f32 %v413, %v494
        %498 = vrot.lane.b32.xlu0 %v287, 127
        %v499 = vpop.permute.xlu0 %498
        %500 = vrot.lane.b32.xlu0 %v288, 127
        %v501 = vpop.permute.xlu0 %500
        %vm502 = vcmp.lt.s32.totalorder %v272, 127
        %v503 = vsel %vm502, %v499, %v501
        %v504 = vsel %vm502, %v501, %v499
        %v506 = vlaneseq
        %v507 = vshrl.u32 %v506, 7
        %v508 = vsub.s32 0, %v507
        %v509 = vrot.slane %v257, %v508
        %v510 = vlaneseq
        %v511 = vshrl.u32 %v510, 7
        %v512 = vsub.s32 1, %v511
        %v513 = vrot.slane %v257, %v512
        %v516 = vmul.f32 %v503, %v509
        %v517 = vmul.f32 %v504, %v513
        %s518 = scalar_lea.vmem %s1, 8
        %v519 = vld [vmem:[%s518] sm:$0xf]
        %v521 = vsel %vm330, %v519, 0
        %v524 = vsel %vm334, %v516, 0
        %v527 = vsel %vm334, %v517, 0
        %529 = vmatprep.subr.mxu0 0.0
        %530 = vmatpush1.msra.mxu0 0.0
        %531 = vmatprep.subr.mxu0 0.0
        %532 = vmatpush1.msra.mxu0 0.0
        %533 = vmatprep.subr.mxu0 0.0
        %534 = vmatpush1.msra.mxu0 0.0
        %535 = vmatprep.subr.mxu0 0.0
        %536 = vmatpush1.msra.mxu0 0.0
        %537 = vmatprep.subr.mxu0 0.0
        %538 = vmatpush1.msra.mxu0 0.0
        %539 = vmatprep.subr.mxu0 0.0
        %540 = vmatpush1.msra.mxu0 0.0
        %541 = vmatprep.subr.mxu0 0.0
        %542 = vmatpush1.msra.mxu0 0.0
        %543 = vmatprep.subr.mxu0 0.0
        %544 = vmatpush1.msra.mxu0 0.0
        %545 = vmatprep.subr.mxu0 0.0
        %546 = vmatpush1.msra.mxu0 0.0
        %547 = vmatprep.subr.mxu0 0.0
        %548 = vmatpush1.msra.mxu0 0.0
        %549 = vmatprep.subr.mxu0 0.0
        %550 = vmatpush1.msra.mxu0 0.0
        %551 = vmatprep.subr.mxu0 0.0
        %552 = vmatpush1.msra.mxu0 0.0
        %553 = vmatprep.subr.mxu0 0.0
        %554 = vmatpush1.msra.mxu0 0.0
        %555 = vmatprep.subr.mxu0 0.0
        %556 = vmatpush1.msra.mxu0 0.0
        %557 = vmatprep.subr.mxu0 0.0
        %558 = vmatpush1.msra.mxu0 0.0
        %559 = vmatprep.subr.mxu0 %v527
        %560 = vmatpush1.msra.mxu0 %v524
        %561 = vmatprep.subr.mxu0 0.0
        %562 = vmatpush2.msra.mxu0 0.0
        %563 = vmatprep.subr.mxu0 0.0
        %564 = vmatpush2.msra.mxu0 0.0
        %565 = vmatprep.subr.mxu0 0.0
        %566 = vmatpush2.msra.mxu0 0.0
        %567 = vmatprep.subr.mxu0 0.0
        %568 = vmatpush2.msra.mxu0 0.0
        %569 = vmatprep.subr.mxu0 0.0
        %570 = vmatpush2.msra.mxu0 0.0
        %571 = vmatprep.subr.mxu0 0.0
        %572 = vmatpush2.msra.mxu0 0.0
        %573 = vmatprep.subr.mxu0 0.0
        %574 = vmatpush2.msra.mxu0 0.0
        %575 = vmatprep.subr.mxu0 0.0
        %576 = vmatpush2.msra.mxu0 0.0
        %577 = vmatprep.subr.mxu0 0.0
        %578 = vmatpush2.msra.mxu0 0.0
        %579 = vmatprep.subr.mxu0 0.0
        %580 = vmatpush2.msra.mxu0 0.0
        %581 = vmatprep.subr.mxu0 0.0
        %582 = vmatpush2.msra.mxu0 0.0
        %583 = vmatprep.subr.mxu0 0.0
        %584 = vmatpush2.msra.mxu0 0.0
        %585 = vmatprep.subr.mxu0 0.0
        %586 = vmatpush2.msra.mxu0 0.0
        %587 = vmatprep.subr.mxu0 0.0
        %588 = vmatpush2.msra.mxu0 0.0
        %589 = vmatprep.subr.mxu0 0.0
        %590 = vmatpush2.msra.mxu0 0.0
        %591 = vmatprep.subr.mxu0 0.0
        %592 = vmatpush2.msra.mxu0 0.0
        %593 = vmatprep.mubr.f32.mxu0 0.0
        %594 = vmatmul.mubr.f32.gmra.mxu0 %v521
        %v595 = vpop.f32.mrf.mxu0
        %v596 = vadd.f32 0.0, %v595
        %v597 = vpop.f32.mrf.mxu0
        %v598 = vadd.f32 0.0, %v597
        %599 = vdwg.mxu0
        %v600 = vadd.f32 %v496, %v596
        %v601 = vadd.f32 %v497, %v598
        %602 = vrot.lane.b32.xlu0 %v250, 1
        %v603 = vpop.permute.xlu0 %602
        %604 = vrot.lane.b32.xlu0 %v265, 1
        %v605 = vpop.permute.xlu0 %604
        %v606 = vsel %vm313, %v603, %v605
        %v607 = vsel %vm313, %v605, %v603
        %v608 = vmul.f32 %v607, %v320
        %v609 = vmul.f32 %v606, %v324
        %s610 = scalar_lea.vmem %s1, 12
        %v611 = vld [vmem:[%s610] sm:$0xf]
        %v613 = vsel %vm330, %v611, 0
        %v616 = vsel %vm334, %v608, 0
        %v619 = vsel %vm334, %v609, 0
        %621 = vmatprep.subr.mxu0 0.0
        %622 = vmatpush1.msra.mxu0 0.0
        %623 = vmatprep.subr.mxu0 0.0
        %624 = vmatpush1.msra.mxu0 0.0
        %625 = vmatprep.subr.mxu0 0.0
        %626 = vmatpush1.msra.mxu0 0.0
        %627 = vmatprep.subr.mxu0 0.0
        %628 = vmatpush1.msra.mxu0 0.0
        %629 = vmatprep.subr.mxu0 0.0
        %630 = vmatpush1.msra.mxu0 0.0
        %631 = vmatprep.subr.mxu0 0.0
        %632 = vmatpush1.msra.mxu0 0.0
        %633 = vmatprep.subr.mxu0 0.0
        %634 = vmatpush1.msra.mxu0 0.0
        %635 = vmatprep.subr.mxu0 0.0
        %636 = vmatpush1.msra.mxu0 0.0
        %637 = vmatprep.subr.mxu0 0.0
        %638 = vmatpush1.msra.mxu0 0.0
        %639 = vmatprep.subr.mxu0 0.0
        %640 = vmatpush1.msra.mxu0 0.0
        %641 = vmatprep.subr.mxu0 0.0
        %642 = vmatpush1.msra.mxu0 0.0
        %643 = vmatprep.subr.mxu0 0.0
        %644 = vmatpush1.msra.mxu0 0.0
        %645 = vmatprep.subr.mxu0 0.0
        %646 = vmatpush1.msra.mxu0 0.0
        %647 = vmatprep.subr.mxu0 0.0
        %648 = vmatpush1.msra.mxu0 0.0
        %649 = vmatprep.subr.mxu0 0.0
        %650 = vmatpush1.msra.mxu0 0.0
        %651 = vmatprep.subr.mxu0 %v619
        %652 = vmatpush1.msra.mxu0 %v616
        %653 = vmatprep.subr.mxu0 0.0
        %654 = vmatpush2.msra.mxu0 0.0
        %655 = vmatprep.subr.mxu0 0.0
        %656 = vmatpush2.msra.mxu0 0.0
        %657 = vmatprep.subr.mxu0 0.0
        %658 = vmatpush2.msra.mxu0 0.0
        %659 = vmatprep.subr.mxu0 0.0
        %660 = vmatpush2.msra.mxu0 0.0
        %661 = vmatprep.subr.mxu0 0.0
        %662 = vmatpush2.msra.mxu0 0.0
        %663 = vmatprep.subr.mxu0 0.0
        %664 = vmatpush2.msra.mxu0 0.0
        %665 = vmatprep.subr.mxu0 0.0
        %666 = vmatpush2.msra.mxu0 0.0
        %667 = vmatprep.subr.mxu0 0.0
        %668 = vmatpush2.msra.mxu0 0.0
        %669 = vmatprep.subr.mxu0 0.0
        %670 = vmatpush2.msra.mxu0 0.0
        %671 = vmatprep.subr.mxu0 0.0
        %672 = vmatpush2.msra.mxu0 0.0
        %673 = vmatprep.subr.mxu0 0.0
        %674 = vmatpush2.msra.mxu0 0.0
        %675 = vmatprep.subr.mxu0 0.0
        %676 = vmatpush2.msra.mxu0 0.0
        %677 = vmatprep.subr.mxu0 0.0
        %678 = vmatpush2.msra.mxu0 0.0
        %679 = vmatprep.subr.mxu0 0.0
        %680 = vmatpush2.msra.mxu0 0.0
        %681 = vmatprep.subr.mxu0 0.0
        %682 = vmatpush2.msra.mxu0 0.0
        %683 = vmatprep.subr.mxu0 0.0
        %684 = vmatpush2.msra.mxu0 0.0
        %685 = vmatprep.mubr.f32.mxu0 0.0
        %686 = vmatmul.mubr.f32.gmra.mxu0 %v613
        %v687 = vpop.f32.mrf.mxu0
        %v688 = vadd.f32 0.0, %v687
        %v689 = vpop.f32.mrf.mxu0
        %v690 = vadd.f32 0.0, %v689
        %691 = vdwg.mxu0
        %v692 = vadd.f32 %v600, %v688
        %v693 = vadd.f32 %v601, %v690
        %s694 = scalar_lea.vmem %s1, 16
        %v695 = vld [vmem:[%s694] sm:$0xf]
        %v697 = vsel %vm330, %v695, 0
        %v699 = vsel %vm334, %v250, 0
        %v701 = vsel %vm334, %v265, 0
        %703 = vmatprep.subr.mxu0 0.0
        %704 = vmatpush1.msra.mxu0 0.0
        %705 = vmatprep.subr.mxu0 0.0
        %706 = vmatpush1.msra.mxu0 0.0
        %707 = vmatprep.subr.mxu0 0.0
        %708 = vmatpush1.msra.mxu0 0.0
        %709 = vmatprep.subr.mxu0 0.0
        %710 = vmatpush1.msra.mxu0 0.0
        %711 = vmatprep.subr.mxu0 0.0
        %712 = vmatpush1.msra.mxu0 0.0
        %713 = vmatprep.subr.mxu0 0.0
        %714 = vmatpush1.msra.mxu0 0.0
        %715 = vmatprep.subr.mxu0 0.0
        %716 = vmatpush1.msra.mxu0 0.0
        %717 = vmatprep.subr.mxu0 0.0
        %718 = vmatpush1.msra.mxu0 0.0
        %719 = vmatprep.subr.mxu0 0.0
        %720 = vmatpush1.msra.mxu0 0.0
        %721 = vmatprep.subr.mxu0 0.0
        %722 = vmatpush1.msra.mxu0 0.0
        %723 = vmatprep.subr.mxu0 0.0
        %724 = vmatpush1.msra.mxu0 0.0
        %725 = vmatprep.subr.mxu0 0.0
        %726 = vmatpush1.msra.mxu0 0.0
        %727 = vmatprep.subr.mxu0 0.0
        %728 = vmatpush1.msra.mxu0 0.0
        %729 = vmatprep.subr.mxu0 0.0
        %730 = vmatpush1.msra.mxu0 0.0
        %731 = vmatprep.subr.mxu0 0.0
        %732 = vmatpush1.msra.mxu0 0.0
        %733 = vmatprep.subr.mxu0 %v701
        %734 = vmatpush1.msra.mxu0 %v699
        %735 = vmatprep.subr.mxu0 0.0
        %736 = vmatpush2.msra.mxu0 0.0
        %737 = vmatprep.subr.mxu0 0.0
        %738 = vmatpush2.msra.mxu0 0.0
        %739 = vmatprep.subr.mxu0 0.0
        %740 = vmatpush2.msra.mxu0 0.0
        %741 = vmatprep.subr.mxu0 0.0
        %742 = vmatpush2.msra.mxu0 0.0
        %743 = vmatprep.subr.mxu0 0.0
        %744 = vmatpush2.msra.mxu0 0.0
        %745 = vmatprep.subr.mxu0 0.0
        %746 = vmatpush2.msra.mxu0 0.0
        %747 = vmatprep.subr.mxu0 0.0
        %748 = vmatpush2.msra.mxu0 0.0
        %749 = vmatprep.subr.mxu0 0.0
        %750 = vmatpush2.msra.mxu0 0.0
        %751 = vmatprep.subr.mxu0 0.0
        %752 = vmatpush2.msra.mxu0 0.0
        %753 = vmatprep.subr.mxu0 0.0
        %754 = vmatpush2.msra.mxu0 0.0
        %755 = vmatprep.subr.mxu0 0.0
        %756 = vmatpush2.msra.mxu0 0.0
        %757 = vmatprep.subr.mxu0 0.0
        %758 = vmatpush2.msra.mxu0 0.0
        %759 = vmatprep.subr.mxu0 0.0
        %760 = vmatpush2.msra.mxu0 0.0
        %761 = vmatprep.subr.mxu0 0.0
        %762 = vmatpush2.msra.mxu0 0.0
        %763 = vmatprep.subr.mxu0 0.0
        %764 = vmatpush2.msra.mxu0 0.0
        %765 = vmatprep.subr.mxu0 0.0
        %766 = vmatpush2.msra.mxu0 0.0
        %767 = vmatprep.mubr.f32.mxu0 0.0
        %768 = vmatmul.mubr.f32.gmra.mxu0 %v697
        %v769 = vpop.f32.mrf.mxu0
        %v770 = vadd.f32 0.0, %v769
        %v771 = vpop.f32.mrf.mxu0
        %v772 = vadd.f32 0.0, %v771
        %773 = vdwg.mxu0
        %v774 = vadd.f32 %v692, %v770
        %v775 = vadd.f32 %v693, %v772
        %776 = vrot.lane.b32.xlu0 %v250, 127
        %v777 = vpop.permute.xlu0 %776
        %778 = vrot.lane.b32.xlu0 %v265, 127
        %v779 = vpop.permute.xlu0 %778
        %v780 = vsel %vm502, %v777, %v779
        %v781 = vsel %vm502, %v779, %v777
        %v782 = vmul.f32 %v780, %v509
        %v783 = vmul.f32 %v781, %v513
        %s784 = scalar_lea.vmem %s1, 20
        %v785 = vld [vmem:[%s784] sm:$0xf]
        %v787 = vsel %vm330, %v785, 0
        %v790 = vsel %vm334, %v782, 0
        %v793 = vsel %vm334, %v783, 0
        %795 = vmatprep.subr.mxu0 0.0
        %796 = vmatpush1.msra.mxu0 0.0
        %797 = vmatprep.subr.mxu0 0.0
        %798 = vmatpush1.msra.mxu0 0.0
        %799 = vmatprep.subr.mxu0 0.0
        %800 = vmatpush1.msra.mxu0 0.0
        %801 = vmatprep.subr.mxu0 0.0
        %802 = vmatpush1.msra.mxu0 0.0
        %803 = vmatprep.subr.mxu0 0.0
        %804 = vmatpush1.msra.mxu0 0.0
        %805 = vmatprep.subr.mxu0 0.0
        %806 = vmatpush1.msra.mxu0 0.0
        %807 = vmatprep.subr.mxu0 0.0
        %808 = vmatpush1.msra.mxu0 0.0
        %809 = vmatprep.subr.mxu0 0.0
        %810 = vmatpush1.msra.mxu0 0.0
        %811 = vmatprep.subr.mxu0 0.0
        %812 = vmatpush1.msra.mxu0 0.0
        %813 = vmatprep.subr.mxu0 0.0
        %814 = vmatpush1.msra.mxu0 0.0
        %815 = vmatprep.subr.mxu0 0.0
        %816 = vmatpush1.msra.mxu0 0.0
        %817 = vmatprep.subr.mxu0 0.0
        %818 = vmatpush1.msra.mxu0 0.0
        %819 = vmatprep.subr.mxu0 0.0
        %820 = vmatpush1.msra.mxu0 0.0
        %821 = vmatprep.subr.mxu0 0.0
        %822 = vmatpush1.msra.mxu0 0.0
        %823 = vmatprep.subr.mxu0 0.0
        %824 = vmatpush1.msra.mxu0 0.0
        %825 = vmatprep.subr.mxu0 %v793
        %826 = vmatpush1.msra.mxu0 %v790
        %827 = vmatprep.subr.mxu0 0.0
        %828 = vmatpush2.msra.mxu0 0.0
        %829 = vmatprep.subr.mxu0 0.0
        %830 = vmatpush2.msra.mxu0 0.0
        %831 = vmatprep.subr.mxu0 0.0
        %832 = vmatpush2.msra.mxu0 0.0
        %833 = vmatprep.subr.mxu0 0.0
        %834 = vmatpush2.msra.mxu0 0.0
        %835 = vmatprep.subr.mxu0 0.0
        %836 = vmatpush2.msra.mxu0 0.0
        %837 = vmatprep.subr.mxu0 0.0
        %838 = vmatpush2.msra.mxu0 0.0
        %839 = vmatprep.subr.mxu0 0.0
        %840 = vmatpush2.msra.mxu0 0.0
        %841 = vmatprep.subr.mxu0 0.0
        %842 = vmatpush2.msra.mxu0 0.0
        %843 = vmatprep.subr.mxu0 0.0
        %844 = vmatpush2.msra.mxu0 0.0
        %845 = vmatprep.subr.mxu0 0.0
        %846 = vmatpush2.msra.mxu0 0.0
        %847 = vmatprep.subr.mxu0 0.0
        %848 = vmatpush2.msra.mxu0 0.0
        %849 = vmatprep.subr.mxu0 0.0
        %850 = vmatpush2.msra.mxu0 0.0
        %851 = vmatprep.subr.mxu0 0.0
        %852 = vmatpush2.msra.mxu0 0.0
        %853 = vmatprep.subr.mxu0 0.0
        %854 = vmatpush2.msra.mxu0 0.0
        %855 = vmatprep.subr.mxu0 0.0
        %856 = vmatpush2.msra.mxu0 0.0
        %857 = vmatprep.subr.mxu0 0.0
        %858 = vmatpush2.msra.mxu0 0.0
        %859 = vmatprep.mubr.f32.mxu0 0.0
        %860 = vmatmul.mubr.f32.gmra.mxu0 %v787
        %v861 = vpop.f32.mrf.mxu0
        %v862 = vadd.f32 0.0, %v861
        %v863 = vpop.f32.mrf.mxu0
        %v864 = vadd.f32 0.0, %v863
        %865 = vdwg.mxu0
        %v866 = vadd.f32 %v774, %v862
        %v867 = vadd.f32 %v775, %v864
        %868 = vrot.lane.b32.xlu0 %v307, 1
        %v869 = vpop.permute.xlu0 %868
        %870 = vrot.lane.b32.xlu0 %v308, 1
        %v871 = vpop.permute.xlu0 %870
        %v872 = vsel %vm313, %v869, %v871
        %v873 = vsel %vm313, %v871, %v869
        %v874 = vmul.f32 %v873, %v320
        %v875 = vmul.f32 %v872, %v324
        %s876 = scalar_lea.vmem %s1, 24
        %v877 = vld [vmem:[%s876] sm:$0xf]
        %v879 = vsel %vm330, %v877, 0
        %v882 = vsel %vm334, %v874, 0
        %v885 = vsel %vm334, %v875, 0
        %887 = vmatprep.subr.mxu0 0.0
        %888 = vmatpush1.msra.mxu0 0.0
        %889 = vmatprep.subr.mxu0 0.0
        %890 = vmatpush1.msra.mxu0 0.0
        %891 = vmatprep.subr.mxu0 0.0
        %892 = vmatpush1.msra.mxu0 0.0
        %893 = vmatprep.subr.mxu0 0.0
        %894 = vmatpush1.msra.mxu0 0.0
        %895 = vmatprep.subr.mxu0 0.0
        %896 = vmatpush1.msra.mxu0 0.0
        %897 = vmatprep.subr.mxu0 0.0
        %898 = vmatpush1.msra.mxu0 0.0
        %899 = vmatprep.subr.mxu0 0.0
        %900 = vmatpush1.msra.mxu0 0.0
        %901 = vmatprep.subr.mxu0 0.0
        %902 = vmatpush1.msra.mxu0 0.0
        %903 = vmatprep.subr.mxu0 0.0
        %904 = vmatpush1.msra.mxu0 0.0
        %905 = vmatprep.subr.mxu0 0.0
        %906 = vmatpush1.msra.mxu0 0.0
        %907 = vmatprep.subr.mxu0 0.0
        %908 = vmatpush1.msra.mxu0 0.0
        %909 = vmatprep.subr.mxu0 0.0
        %910 = vmatpush1.msra.mxu0 0.0
        %911 = vmatprep.subr.mxu0 0.0
        %912 = vmatpush1.msra.mxu0 0.0
        %913 = vmatprep.subr.mxu0 0.0
        %914 = vmatpush1.msra.mxu0 0.0
        %915 = vmatprep.subr.mxu0 0.0
        %916 = vmatpush1.msra.mxu0 0.0
        %917 = vmatprep.subr.mxu0 %v885
        %918 = vmatpush1.msra.mxu0 %v882
        %919 = vmatprep.subr.mxu0 0.0
        %920 = vmatpush2.msra.mxu0 0.0
        %921 = vmatprep.subr.mxu0 0.0
        %922 = vmatpush2.msra.mxu0 0.0
        %923 = vmatprep.subr.mxu0 0.0
        %924 = vmatpush2.msra.mxu0 0.0
        %925 = vmatprep.subr.mxu0 0.0
        %926 = vmatpush2.msra.mxu0 0.0
        %927 = vmatprep.subr.mxu0 0.0
        %928 = vmatpush2.msra.mxu0 0.0
        %929 = vmatprep.subr.mxu0 0.0
        %930 = vmatpush2.msra.mxu0 0.0
        %931 = vmatprep.subr.mxu0 0.0
        %932 = vmatpush2.msra.mxu0 0.0
        %933 = vmatprep.subr.mxu0 0.0
        %934 = vmatpush2.msra.mxu0 0.0
        %935 = vmatprep.subr.mxu0 0.0
        %936 = vmatpush2.msra.mxu0 0.0
        %937 = vmatprep.subr.mxu0 0.0
        %938 = vmatpush2.msra.mxu0 0.0
        %939 = vmatprep.subr.mxu0 0.0
        %940 = vmatpush2.msra.mxu0 0.0
        %941 = vmatprep.subr.mxu0 0.0
        %942 = vmatpush2.msra.mxu0 0.0
        %943 = vmatprep.subr.mxu0 0.0
        %944 = vmatpush2.msra.mxu0 0.0
        %945 = vmatprep.subr.mxu0 0.0
        %946 = vmatpush2.msra.mxu0 0.0
        %947 = vmatprep.subr.mxu0 0.0
        %948 = vmatpush2.msra.mxu0 0.0
        %949 = vmatprep.subr.mxu0 0.0
        %950 = vmatpush2.msra.mxu0 0.0
        %951 = vmatprep.mubr.f32.mxu0 0.0
        %952 = vmatmul.mubr.f32.gmra.mxu0 %v879
        %v953 = vpop.f32.mrf.mxu0
        %v954 = vadd.f32 0.0, %v953
        %v955 = vpop.f32.mrf.mxu0
        %v956 = vadd.f32 0.0, %v955
        %957 = vdwg.mxu0
        %v958 = vadd.f32 %v866, %v954
        %v959 = vadd.f32 %v867, %v956
        %s960 = scalar_lea.vmem %s1, 28
        %v961 = vld [vmem:[%s960] sm:$0xf]
        %v963 = vsel %vm330, %v961, 0
        %v966 = vsel %vm334, %v307, 0
        %v969 = vsel %vm334, %v308, 0
        %971 = vmatprep.subr.mxu0 0.0
        %972 = vmatpush1.msra.mxu0 0.0
        %973 = vmatprep.subr.mxu0 0.0
        %974 = vmatpush1.msra.mxu0 0.0
        %975 = vmatprep.subr.mxu0 0.0
        %976 = vmatpush1.msra.mxu0 0.0
        %977 = vmatprep.subr.mxu0 0.0
        %978 = vmatpush1.msra.mxu0 0.0
        %979 = vmatprep.subr.mxu0 0.0
        %980 = vmatpush1.msra.mxu0 0.0
        %981 = vmatprep.subr.mxu0 0.0
        %982 = vmatpush1.msra.mxu0 0.0
        %983 = vmatprep.subr.mxu0 0.0
        %984 = vmatpush1.msra.mxu0 0.0
        %985 = vmatprep.subr.mxu0 0.0
        %986 = vmatpush1.msra.mxu0 0.0
        %987 = vmatprep.subr.mxu0 0.0
        %988 = vmatpush1.msra.mxu0 0.0
        %989 = vmatprep.subr.mxu0 0.0
        %990 = vmatpush1.msra.mxu0 0.0
        %991 = vmatprep.subr.mxu0 0.0
        %992 = vmatpush1.msra.mxu0 0.0
        %993 = vmatprep.subr.mxu0 0.0
        %994 = vmatpush1.msra.mxu0 0.0
        %995 = vmatprep.subr.mxu0 0.0
        %996 = vmatpush1.msra.mxu0 0.0
        %997 = vmatprep.subr.mxu0 0.0
        %998 = vmatpush1.msra.mxu0 0.0
        %999 = vmatprep.subr.mxu0 0.0
        %1000 = vmatpush1.msra.mxu0 0.0
        %1001 = vmatprep.subr.mxu0 %v969
        %1002 = vmatpush1.msra.mxu0 %v966
        %1003 = vmatprep.subr.mxu0 0.0
        %1004 = vmatpush2.msra.mxu0 0.0
        %1005 = vmatprep.subr.mxu0 0.0
        %1006 = vmatpush2.msra.mxu0 0.0
        %1007 = vmatprep.subr.mxu0 0.0
        %1008 = vmatpush2.msra.mxu0 0.0
        %1009 = vmatprep.subr.mxu0 0.0
        %1010 = vmatpush2.msra.mxu0 0.0
        %1011 = vmatprep.subr.mxu0 0.0
        %1012 = vmatpush2.msra.mxu0 0.0
        %1013 = vmatprep.subr.mxu0 0.0
        %1014 = vmatpush2.msra.mxu0 0.0
        %1015 = vmatprep.subr.mxu0 0.0
        %1016 = vmatpush2.msra.mxu0 0.0
        %1017 = vmatprep.subr.mxu0 0.0
        %1018 = vmatpush2.msra.mxu0 0.0
        %1019 = vmatprep.subr.mxu0 0.0
        %1020 = vmatpush2.msra.mxu0 0.0
        %1021 = vmatprep.subr.mxu0 0.0
        %1022 = vmatpush2.msra.mxu0 0.0
        %1023 = vmatprep.subr.mxu0 0.0
        %1024 = vmatpush2.msra.mxu0 0.0
        %1025 = vmatprep.subr.mxu0 0.0
        %1026 = vmatpush2.msra.mxu0 0.0
        %1027 = vmatprep.subr.mxu0 0.0
        %1028 = vmatpush2.msra.mxu0 0.0
        %1029 = vmatprep.subr.mxu0 0.0
        %1030 = vmatpush2.msra.mxu0 0.0
        %1031 = vmatprep.subr.mxu0 0.0
        %1032 = vmatpush2.msra.mxu0 0.0
        %1033 = vmatprep.subr.mxu0 0.0
        %1034 = vmatpush2.msra.mxu0 0.0
        %1035 = vmatprep.mubr.f32.mxu0 0.0
        %1036 = vmatmul.mubr.f32.gmra.mxu0 %v963
        %v1037 = vpop.f32.mrf.mxu0
        %v1038 = vadd.f32 0.0, %v1037
        %v1039 = vpop.f32.mrf.mxu0
        %v1040 = vadd.f32 0.0, %v1039
        %1041 = vdwg.mxu0
        %v1042 = vadd.f32 %v958, %v1038
        %v1043 = vadd.f32 %v959, %v1040
        %1044 = vrot.lane.b32.xlu0 %v307, 127
        %v1045 = vpop.permute.xlu0 %1044
        %1046 = vrot.lane.b32.xlu0 %v308, 127
        %v1047 = vpop.permute.xlu0 %1046
        %v1048 = vsel %vm502, %v1045, %v1047
        %v1049 = vsel %vm502, %v1047, %v1045
        %v1050 = vmul.f32 %v1048, %v509
        %v1051 = vmul.f32 %v1049, %v513
        %s1052 = scalar_lea.vmem %s1, 32
        %v1053 = vld [vmem:[%s1052] sm:$0xf]
        %v1055 = vsel %vm330, %v1053, 0
        %v1058 = vsel %vm334, %v1050, 0
        %v1061 = vsel %vm334, %v1051, 0
        %1063 = vmatprep.subr.mxu0 0.0
        %1064 = vmatpush1.msra.mxu0 0.0
        %1065 = vmatprep.subr.mxu0 0.0
        %1066 = vmatpush1.msra.mxu0 0.0
        %1067 = vmatprep.subr.mxu0 0.0
        %1068 = vmatpush1.msra.mxu0 0.0
        %1069 = vmatprep.subr.mxu0 0.0
        %1070 = vmatpush1.msra.mxu0 0.0
        %1071 = vmatprep.subr.mxu0 0.0
        %1072 = vmatpush1.msra.mxu0 0.0
        %1073 = vmatprep.subr.mxu0 0.0
        %1074 = vmatpush1.msra.mxu0 0.0
        %1075 = vmatprep.subr.mxu0 0.0
        %1076 = vmatpush1.msra.mxu0 0.0
        %1077 = vmatprep.subr.mxu0 0.0
        %1078 = vmatpush1.msra.mxu0 0.0
        %1079 = vmatprep.subr.mxu0 0.0
        %1080 = vmatpush1.msra.mxu0 0.0
        %1081 = vmatprep.subr.mxu0 0.0
        %1082 = vmatpush1.msra.mxu0 0.0
        %1083 = vmatprep.subr.mxu0 0.0
        %1084 = vmatpush1.msra.mxu0 0.0
        %1085 = vmatprep.subr.mxu0 0.0
        %1086 = vmatpush1.msra.mxu0 0.0
        %1087 = vmatprep.subr.mxu0 0.0
        %1088 = vmatpush1.msra.mxu0 0.0
        %1089 = vmatprep.subr.mxu0 0.0
        %1090 = vmatpush1.msra.mxu0 0.0
        %1091 = vmatprep.subr.mxu0 0.0
        %1092 = vmatpush1.msra.mxu0 0.0
        %1093 = vmatprep.subr.mxu0 %v1061
        %1094 = vmatpush1.msra.mxu0 %v1058
        %1095 = vmatprep.subr.mxu0 0.0
        %1096 = vmatpush2.msra.mxu0 0.0
        %1097 = vmatprep.subr.mxu0 0.0
        %1098 = vmatpush2.msra.mxu0 0.0
        %1099 = vmatprep.subr.mxu0 0.0
        %1100 = vmatpush2.msra.mxu0 0.0
        %1101 = vmatprep.subr.mxu0 0.0
        %1102 = vmatpush2.msra.mxu0 0.0
        %1103 = vmatprep.subr.mxu0 0.0
        %1104 = vmatpush2.msra.mxu0 0.0
        %1105 = vmatprep.subr.mxu0 0.0
        %1106 = vmatpush2.msra.mxu0 0.0
        %1107 = vmatprep.subr.mxu0 0.0
        %1108 = vmatpush2.msra.mxu0 0.0
        %1109 = vmatprep.subr.mxu0 0.0
        %1110 = vmatpush2.msra.mxu0 0.0
        %1111 = vmatprep.subr.mxu0 0.0
        %1112 = vmatpush2.msra.mxu0 0.0
        %1113 = vmatprep.subr.mxu0 0.0
        %1114 = vmatpush2.msra.mxu0 0.0
        %1115 = vmatprep.subr.mxu0 0.0
        %1116 = vmatpush2.msra.mxu0 0.0
        %1117 = vmatprep.subr.mxu0 0.0
        %1118 = vmatpush2.msra.mxu0 0.0
        %1119 = vmatprep.subr.mxu0 0.0
        %1120 = vmatpush2.msra.mxu0 0.0
        %1121 = vmatprep.subr.mxu0 0.0
        %1122 = vmatpush2.msra.mxu0 0.0
        %1123 = vmatprep.subr.mxu0 0.0
        %1124 = vmatpush2.msra.mxu0 0.0
        %1125 = vmatprep.subr.mxu0 0.0
        %1126 = vmatpush2.msra.mxu0 0.0
        %1127 = vmatprep.mubr.f32.mxu0 0.0
        %1128 = vmatmul.mubr.f32.gmra.mxu0 %v1055
        %v1129 = vpop.f32.mrf.mxu0
        %v1130 = vadd.f32 0.0, %v1129
        %v1131 = vpop.f32.mrf.mxu0
        %v1132 = vadd.f32 0.0, %v1131
        %1133 = vdwg.mxu0
        %v1134 = vadd.f32 %v1042, %v1130
        %v1135 = vadd.f32 %v1043, %v1132
        %v1136 = vmax.f32 %v1134, 0.0
        %v1137 = vmax.f32 %v1135, 0.0
        %v1138 = vld [vmem:[%s4] sm:$0xf]
        %1140 = vset.pattern.permute.xlu0 0
        %1141 = vperm.xlu0 %1140, %v1138
        %v1142 = vpop.permute.xlu0 %1141
        %1144 = vrot.lane.b32.xlu0 %v1136, 16
        %v1145 = vpop.permute.xlu0 %1144
        %1146 = vrot.lane.b32.xlu0 %v1137, 16
        %v1147 = vpop.permute.xlu0 %1146
        %v1148 = vsel %vm273, %v1145, %v1147
        %v1149 = vsel %vm273, %v1147, %v1145
        %v1150 = vmul.f32 %v1149, %v280
        %v1151 = vmul.f32 %v1148, %v284
        %1152 = vrot.lane.b32.xlu0 %v1136, 112
        %v1153 = vpop.permute.xlu0 %1152
        %1154 = vrot.lane.b32.xlu0 %v1137, 112
        %v1155 = vpop.permute.xlu0 %1154
        %v1156 = vsel %vm293, %v1153, %v1155
        %v1157 = vsel %vm293, %v1155, %v1153
        %v1158 = vmul.f32 %v1156, %v300
        %v1159 = vmul.f32 %v1157, %v304
        %1160 = vrot.lane.b32.xlu0 %v1150, 1
        %v1161 = vpop.permute.xlu0 %1160
        %1162 = vrot.lane.b32.xlu0 %v1151, 1
        %v1163 = vpop.permute.xlu0 %1162
        %v1164 = vsel %vm313, %v1161, %v1163
        %v1165 = vsel %vm313, %v1163, %v1161
        %v1166 = vmul.f32 %v1165, %v320
        %v1167 = vmul.f32 %v1164, %v324
        %v1168 = vld [vmem:[%s2] sm:$0xf]
        %v1170 = vsel %vm330, %v1168, 0
        %v1173 = vsel %vm334, %v1166, 0
        %v1176 = vsel %vm334, %v1167, 0
        %1178 = vmatprep.subr.mxu0 0.0
        %1179 = vmatpush1.msra.mxu0 0.0
        %1180 = vmatprep.subr.mxu0 0.0
        %1181 = vmatpush1.msra.mxu0 0.0
        %1182 = vmatprep.subr.mxu0 0.0
        %1183 = vmatpush1.msra.mxu0 0.0
        %1184 = vmatprep.subr.mxu0 0.0
        %1185 = vmatpush1.msra.mxu0 0.0
        %1186 = vmatprep.subr.mxu0 0.0
        %1187 = vmatpush1.msra.mxu0 0.0
        %1188 = vmatprep.subr.mxu0 0.0
        %1189 = vmatpush1.msra.mxu0 0.0
        %1190 = vmatprep.subr.mxu0 0.0
        %1191 = vmatpush1.msra.mxu0 0.0
        %1192 = vmatprep.subr.mxu0 0.0
        %1193 = vmatpush1.msra.mxu0 0.0
        %1194 = vmatprep.subr.mxu0 0.0
        %1195 = vmatpush1.msra.mxu0 0.0
        %1196 = vmatprep.subr.mxu0 0.0
        %1197 = vmatpush1.msra.mxu0 0.0
        %1198 = vmatprep.subr.mxu0 0.0
        %1199 = vmatpush1.msra.mxu0 0.0
        %1200 = vmatprep.subr.mxu0 0.0
        %1201 = vmatpush1.msra.mxu0 0.0
        %1202 = vmatprep.subr.mxu0 0.0
        %1203 = vmatpush1.msra.mxu0 0.0
        %1204 = vmatprep.subr.mxu0 0.0
        %1205 = vmatpush1.msra.mxu0 0.0
        %1206 = vmatprep.subr.mxu0 0.0
        %1207 = vmatpush1.msra.mxu0 0.0
        %1208 = vmatprep.subr.mxu0 %v1176
        %1209 = vmatpush1.msra.mxu0 %v1173
        %1210 = vmatprep.subr.mxu0 0.0
        %1211 = vmatpush2.msra.mxu0 0.0
        %1212 = vmatprep.subr.mxu0 0.0
        %1213 = vmatpush2.msra.mxu0 0.0
        %1214 = vmatprep.subr.mxu0 0.0
        %1215 = vmatpush2.msra.mxu0 0.0
        %1216 = vmatprep.subr.mxu0 0.0
        %1217 = vmatpush2.msra.mxu0 0.0
        %1218 = vmatprep.subr.mxu0 0.0
        %1219 = vmatpush2.msra.mxu0 0.0
        %1220 = vmatprep.subr.mxu0 0.0
        %1221 = vmatpush2.msra.mxu0 0.0
        %1222 = vmatprep.subr.mxu0 0.0
        %1223 = vmatpush2.msra.mxu0 0.0
        %1224 = vmatprep.subr.mxu0 0.0
        %1225 = vmatpush2.msra.mxu0 0.0
        %1226 = vmatprep.subr.mxu0 0.0
        %1227 = vmatpush2.msra.mxu0 0.0
        %1228 = vmatprep.subr.mxu0 0.0
        %1229 = vmatpush2.msra.mxu0 0.0
        %1230 = vmatprep.subr.mxu0 0.0
        %1231 = vmatpush2.msra.mxu0 0.0
        %1232 = vmatprep.subr.mxu0 0.0
        %1233 = vmatpush2.msra.mxu0 0.0
        %1234 = vmatprep.subr.mxu0 0.0
        %1235 = vmatpush2.msra.mxu0 0.0
        %1236 = vmatprep.subr.mxu0 0.0
        %1237 = vmatpush2.msra.mxu0 0.0
        %1238 = vmatprep.subr.mxu0 0.0
        %1239 = vmatpush2.msra.mxu0 0.0
        %1240 = vmatprep.subr.mxu0 0.0
        %1241 = vmatpush2.msra.mxu0 0.0
        %1242 = vmatprep.mubr.f32.mxu0 0.0
        %1243 = vmatmul.mubr.f32.gmra.mxu0 %v1170
        %v1244 = vpop.f32.mrf.mxu0
        %v1245 = vadd.f32 0.0, %v1244
        %v1246 = vpop.f32.mrf.mxu0
        %v1247 = vadd.f32 0.0, %v1246
        %1248 = vdwg.mxu0
        %v1249 = vadd.f32 %v1142, %v1245
        %v1250 = vadd.f32 %v1142, %v1247
        %s1251 = scalar_lea.vmem %s2, 4
        %v1252 = vld [vmem:[%s1251] sm:$0xf]
        %v1254 = vsel %vm330, %v1252, 0
        %v1257 = vsel %vm334, %v1150, 0
        %v1260 = vsel %vm334, %v1151, 0
        %1262 = vmatprep.subr.mxu0 0.0
        %1263 = vmatpush1.msra.mxu0 0.0
        %1264 = vmatprep.subr.mxu0 0.0
        %1265 = vmatpush1.msra.mxu0 0.0
        %1266 = vmatprep.subr.mxu0 0.0
        %1267 = vmatpush1.msra.mxu0 0.0
        %1268 = vmatprep.subr.mxu0 0.0
        %1269 = vmatpush1.msra.mxu0 0.0
        %1270 = vmatprep.subr.mxu0 0.0
        %1271 = vmatpush1.msra.mxu0 0.0
        %1272 = vmatprep.subr.mxu0 0.0
        %1273 = vmatpush1.msra.mxu0 0.0
        %1274 = vmatprep.subr.mxu0 0.0
        %1275 = vmatpush1.msra.mxu0 0.0
        %1276 = vmatprep.subr.mxu0 0.0
        %1277 = vmatpush1.msra.mxu0 0.0
        %1278 = vmatprep.subr.mxu0 0.0
        %1279 = vmatpush1.msra.mxu0 0.0
        %1280 = vmatprep.subr.mxu0 0.0
        %1281 = vmatpush1.msra.mxu0 0.0
        %1282 = vmatprep.subr.mxu0 0.0
        %1283 = vmatpush1.msra.mxu0 0.0
        %1284 = vmatprep.subr.mxu0 0.0
        %1285 = vmatpush1.msra.mxu0 0.0
        %1286 = vmatprep.subr.mxu0 0.0
        %1287 = vmatpush1.msra.mxu0 0.0
        %1288 = vmatprep.subr.mxu0 0.0
        %1289 = vmatpush1.msra.mxu0 0.0
        %1290 = vmatprep.subr.mxu0 0.0
        %1291 = vmatpush1.msra.mxu0 0.0
        %1292 = vmatprep.subr.mxu0 %v1260
        %1293 = vmatpush1.msra.mxu0 %v1257
        %1294 = vmatprep.subr.mxu0 0.0
        %1295 = vmatpush2.msra.mxu0 0.0
        %1296 = vmatprep.subr.mxu0 0.0
        %1297 = vmatpush2.msra.mxu0 0.0
        %1298 = vmatprep.subr.mxu0 0.0
        %1299 = vmatpush2.msra.mxu0 0.0
        %1300 = vmatprep.subr.mxu0 0.0
        %1301 = vmatpush2.msra.mxu0 0.0
        %1302 = vmatprep.subr.mxu0 0.0
        %1303 = vmatpush2.msra.mxu0 0.0
        %1304 = vmatprep.subr.mxu0 0.0
        %1305 = vmatpush2.msra.mxu0 0.0
        %1306 = vmatprep.subr.mxu0 0.0
        %1307 = vmatpush2.msra.mxu0 0.0
        %1308 = vmatprep.subr.mxu0 0.0
        %1309 = vmatpush2.msra.mxu0 0.0
        %1310 = vmatprep.subr.mxu0 0.0
        %1311 = vmatpush2.msra.mxu0 0.0
        %1312 = vmatprep.subr.mxu0 0.0
        %1313 = vmatpush2.msra.mxu0 0.0
        %1314 = vmatprep.subr.mxu0 0.0
        %1315 = vmatpush2.msra.mxu0 0.0
        %1316 = vmatprep.subr.mxu0 0.0
        %1317 = vmatpush2.msra.mxu0 0.0
        %1318 = vmatprep.subr.mxu0 0.0
        %1319 = vmatpush2.msra.mxu0 0.0
        %1320 = vmatprep.subr.mxu0 0.0
        %1321 = vmatpush2.msra.mxu0 0.0
        %1322 = vmatprep.subr.mxu0 0.0
        %1323 = vmatpush2.msra.mxu0 0.0
        %1324 = vmatprep.subr.mxu0 0.0
        %1325 = vmatpush2.msra.mxu0 0.0
        %1326 = vmatprep.mubr.f32.mxu0 0.0
        %1327 = vmatmul.mubr.f32.gmra.mxu0 %v1254
        %v1328 = vpop.f32.mrf.mxu0
        %v1329 = vadd.f32 0.0, %v1328
        %v1330 = vpop.f32.mrf.mxu0
        %v1331 = vadd.f32 0.0, %v1330
        %1332 = vdwg.mxu0
        %v1333 = vadd.f32 %v1249, %v1329
        %v1334 = vadd.f32 %v1250, %v1331
        %1335 = vrot.lane.b32.xlu0 %v1150, 127
        %v1336 = vpop.permute.xlu0 %1335
        %1337 = vrot.lane.b32.xlu0 %v1151, 127
        %v1338 = vpop.permute.xlu0 %1337
        %v1339 = vsel %vm502, %v1336, %v1338
        %v1340 = vsel %vm502, %v1338, %v1336
        %v1341 = vmul.f32 %v1339, %v509
        %v1342 = vmul.f32 %v1340, %v513
        %s1343 = scalar_lea.vmem %s2, 8
        %v1344 = vld [vmem:[%s1343] sm:$0xf]
        %v1346 = vsel %vm330, %v1344, 0
        %v1349 = vsel %vm334, %v1341, 0
        %v1352 = vsel %vm334, %v1342, 0
        %1354 = vmatprep.subr.mxu0 0.0
        %1355 = vmatpush1.msra.mxu0 0.0
        %1356 = vmatprep.subr.mxu0 0.0
        %1357 = vmatpush1.msra.mxu0 0.0
        %1358 = vmatprep.subr.mxu0 0.0
        %1359 = vmatpush1.msra.mxu0 0.0
        %1360 = vmatprep.subr.mxu0 0.0
        %1361 = vmatpush1.msra.mxu0 0.0
        %1362 = vmatprep.subr.mxu0 0.0
        %1363 = vmatpush1.msra.mxu0 0.0
        %1364 = vmatprep.subr.mxu0 0.0
        %1365 = vmatpush1.msra.mxu0 0.0
        %1366 = vmatprep.subr.mxu0 0.0
        %1367 = vmatpush1.msra.mxu0 0.0
        %1368 = vmatprep.subr.mxu0 0.0
        %1369 = vmatpush1.msra.mxu0 0.0
        %1370 = vmatprep.subr.mxu0 0.0
        %1371 = vmatpush1.msra.mxu0 0.0
        %1372 = vmatprep.subr.mxu0 0.0
        %1373 = vmatpush1.msra.mxu0 0.0
        %1374 = vmatprep.subr.mxu0 0.0
        %1375 = vmatpush1.msra.mxu0 0.0
        %1376 = vmatprep.subr.mxu0 0.0
        %1377 = vmatpush1.msra.mxu0 0.0
        %1378 = vmatprep.subr.mxu0 0.0
        %1379 = vmatpush1.msra.mxu0 0.0
        %1380 = vmatprep.subr.mxu0 0.0
        %1381 = vmatpush1.msra.mxu0 0.0
        %1382 = vmatprep.subr.mxu0 0.0
        %1383 = vmatpush1.msra.mxu0 0.0
        %1384 = vmatprep.subr.mxu0 %v1352
        %1385 = vmatpush1.msra.mxu0 %v1349
        %1386 = vmatprep.subr.mxu0 0.0
        %1387 = vmatpush2.msra.mxu0 0.0
        %1388 = vmatprep.subr.mxu0 0.0
        %1389 = vmatpush2.msra.mxu0 0.0
        %1390 = vmatprep.subr.mxu0 0.0
        %1391 = vmatpush2.msra.mxu0 0.0
        %1392 = vmatprep.subr.mxu0 0.0
        %1393 = vmatpush2.msra.mxu0 0.0
        %1394 = vmatprep.subr.mxu0 0.0
        %1395 = vmatpush2.msra.mxu0 0.0
        %1396 = vmatprep.subr.mxu0 0.0
        %1397 = vmatpush2.msra.mxu0 0.0
        %1398 = vmatprep.subr.mxu0 0.0
        %1399 = vmatpush2.msra.mxu0 0.0
        %1400 = vmatprep.subr.mxu0 0.0
        %1401 = vmatpush2.msra.mxu0 0.0
        %1402 = vmatprep.subr.mxu0 0.0
        %1403 = vmatpush2.msra.mxu0 0.0
        %1404 = vmatprep.subr.mxu0 0.0
        %1405 = vmatpush2.msra.mxu0 0.0
        %1406 = vmatprep.subr.mxu0 0.0
        %1407 = vmatpush2.msra.mxu0 0.0
        %1408 = vmatprep.subr.mxu0 0.0
        %1409 = vmatpush2.msra.mxu0 0.0
        %1410 = vmatprep.subr.mxu0 0.0
        %1411 = vmatpush2.msra.mxu0 0.0
        %1412 = vmatprep.subr.mxu0 0.0
        %1413 = vmatpush2.msra.mxu0 0.0
        %1414 = vmatprep.subr.mxu0 0.0
        %1415 = vmatpush2.msra.mxu0 0.0
        %1416 = vmatprep.subr.mxu0 0.0
        %1417 = vmatpush2.msra.mxu0 0.0
        %1418 = vmatprep.mubr.f32.mxu0 0.0
        %1419 = vmatmul.mubr.f32.gmra.mxu0 %v1346
        %v1420 = vpop.f32.mrf.mxu0
        %v1421 = vadd.f32 0.0, %v1420
        %v1422 = vpop.f32.mrf.mxu0
        %v1423 = vadd.f32 0.0, %v1422
        %1424 = vdwg.mxu0
        %v1425 = vadd.f32 %v1333, %v1421
        %v1426 = vadd.f32 %v1334, %v1423
        %1427 = vrot.lane.b32.xlu0 %v1136, 1
        %v1428 = vpop.permute.xlu0 %1427
        %1429 = vrot.lane.b32.xlu0 %v1137, 1
        %v1430 = vpop.permute.xlu0 %1429
        %v1431 = vsel %vm313, %v1428, %v1430
        %v1432 = vsel %vm313, %v1430, %v1428
        %v1433 = vmul.f32 %v1432, %v320
        %v1434 = vmul.f32 %v1431, %v324
        %s1435 = scalar_lea.vmem %s2, 12
        %v1436 = vld [vmem:[%s1435] sm:$0xf]
        %v1438 = vsel %vm330, %v1436, 0
        %v1441 = vsel %vm334, %v1433, 0
        %v1444 = vsel %vm334, %v1434, 0
        %1446 = vmatprep.subr.mxu0 0.0
        %1447 = vmatpush1.msra.mxu0 0.0
        %1448 = vmatprep.subr.mxu0 0.0
        %1449 = vmatpush1.msra.mxu0 0.0
        %1450 = vmatprep.subr.mxu0 0.0
        %1451 = vmatpush1.msra.mxu0 0.0
        %1452 = vmatprep.subr.mxu0 0.0
        %1453 = vmatpush1.msra.mxu0 0.0
        %1454 = vmatprep.subr.mxu0 0.0
        %1455 = vmatpush1.msra.mxu0 0.0
        %1456 = vmatprep.subr.mxu0 0.0
        %1457 = vmatpush1.msra.mxu0 0.0
        %1458 = vmatprep.subr.mxu0 0.0
        %1459 = vmatpush1.msra.mxu0 0.0
        %1460 = vmatprep.subr.mxu0 0.0
        %1461 = vmatpush1.msra.mxu0 0.0
        %1462 = vmatprep.subr.mxu0 0.0
        %1463 = vmatpush1.msra.mxu0 0.0
        %1464 = vmatprep.subr.mxu0 0.0
        %1465 = vmatpush1.msra.mxu0 0.0
        %1466 = vmatprep.subr.mxu0 0.0
        %1467 = vmatpush1.msra.mxu0 0.0
        %1468 = vmatprep.subr.mxu0 0.0
        %1469 = vmatpush1.msra.mxu0 0.0
        %1470 = vmatprep.subr.mxu0 0.0
        %1471 = vmatpush1.msra.mxu0 0.0
        %1472 = vmatprep.subr.mxu0 0.0
        %1473 = vmatpush1.msra.mxu0 0.0
        %1474 = vmatprep.subr.mxu0 0.0
        %1475 = vmatpush1.msra.mxu0 0.0
        %1476 = vmatprep.subr.mxu0 %v1444
        %1477 = vmatpush1.msra.mxu0 %v1441
        %1478 = vmatprep.subr.mxu0 0.0
        %1479 = vmatpush2.msra.mxu0 0.0
        %1480 = vmatprep.subr.mxu0 0.0
        %1481 = vmatpush2.msra.mxu0 0.0
        %1482 = vmatprep.subr.mxu0 0.0
        %1483 = vmatpush2.msra.mxu0 0.0
        %1484 = vmatprep.subr.mxu0 0.0
        %1485 = vmatpush2.msra.mxu0 0.0
        %1486 = vmatprep.subr.mxu0 0.0
        %1487 = vmatpush2.msra.mxu0 0.0
        %1488 = vmatprep.subr.mxu0 0.0
        %1489 = vmatpush2.msra.mxu0 0.0
        %1490 = vmatprep.subr.mxu0 0.0
        %1491 = vmatpush2.msra.mxu0 0.0
        %1492 = vmatprep.subr.mxu0 0.0
        %1493 = vmatpush2.msra.mxu0 0.0
        %1494 = vmatprep.subr.mxu0 0.0
        %1495 = vmatpush2.msra.mxu0 0.0
        %1496 = vmatprep.subr.mxu0 0.0
        %1497 = vmatpush2.msra.mxu0 0.0
        %1498 = vmatprep.subr.mxu0 0.0
        %1499 = vmatpush2.msra.mxu0 0.0
        %1500 = vmatprep.subr.mxu0 0.0
        %1501 = vmatpush2.msra.mxu0 0.0
        %1502 = vmatprep.subr.mxu0 0.0
        %1503 = vmatpush2.msra.mxu0 0.0
        %1504 = vmatprep.subr.mxu0 0.0
        %1505 = vmatpush2.msra.mxu0 0.0
        %1506 = vmatprep.subr.mxu0 0.0
        %1507 = vmatpush2.msra.mxu0 0.0
        %1508 = vmatprep.subr.mxu0 0.0
        %1509 = vmatpush2.msra.mxu0 0.0
        %1510 = vmatprep.mubr.f32.mxu0 0.0
        %1511 = vmatmul.mubr.f32.gmra.mxu0 %v1438
        %v1512 = vpop.f32.mrf.mxu0
        %v1513 = vadd.f32 0.0, %v1512
        %v1514 = vpop.f32.mrf.mxu0
        %v1515 = vadd.f32 0.0, %v1514
        %1516 = vdwg.mxu0
        %v1517 = vadd.f32 %v1425, %v1513
        %v1518 = vadd.f32 %v1426, %v1515
        %s1519 = scalar_lea.vmem %s2, 16
        %v1520 = vld [vmem:[%s1519] sm:$0xf]
        %v1522 = vsel %vm330, %v1520, 0
        %v1525 = vsel %vm334, %v1136, 0
        %v1528 = vsel %vm334, %v1137, 0
        %1530 = vmatprep.subr.mxu0 0.0
        %1531 = vmatpush1.msra.mxu0 0.0
        %1532 = vmatprep.subr.mxu0 0.0
        %1533 = vmatpush1.msra.mxu0 0.0
        %1534 = vmatprep.subr.mxu0 0.0
        %1535 = vmatpush1.msra.mxu0 0.0
        %1536 = vmatprep.subr.mxu0 0.0
        %1537 = vmatpush1.msra.mxu0 0.0
        %1538 = vmatprep.subr.mxu0 0.0
        %1539 = vmatpush1.msra.mxu0 0.0
        %1540 = vmatprep.subr.mxu0 0.0
        %1541 = vmatpush1.msra.mxu0 0.0
        %1542 = vmatprep.subr.mxu0 0.0
        %1543 = vmatpush1.msra.mxu0 0.0
        %1544 = vmatprep.subr.mxu0 0.0
        %1545 = vmatpush1.msra.mxu0 0.0
        %1546 = vmatprep.subr.mxu0 0.0
        %1547 = vmatpush1.msra.mxu0 0.0
        %1548 = vmatprep.subr.mxu0 0.0
        %1549 = vmatpush1.msra.mxu0 0.0
        %1550 = vmatprep.subr.mxu0 0.0
        %1551 = vmatpush1.msra.mxu0 0.0
        %1552 = vmatprep.subr.mxu0 0.0
        %1553 = vmatpush1.msra.mxu0 0.0
        %1554 = vmatprep.subr.mxu0 0.0
        %1555 = vmatpush1.msra.mxu0 0.0
        %1556 = vmatprep.subr.mxu0 0.0
        %1557 = vmatpush1.msra.mxu0 0.0
        %1558 = vmatprep.subr.mxu0 0.0
        %1559 = vmatpush1.msra.mxu0 0.0
        %1560 = vmatprep.subr.mxu0 %v1528
        %1561 = vmatpush1.msra.mxu0 %v1525
        %1562 = vmatprep.subr.mxu0 0.0
        %1563 = vmatpush2.msra.mxu0 0.0
        %1564 = vmatprep.subr.mxu0 0.0
        %1565 = vmatpush2.msra.mxu0 0.0
        %1566 = vmatprep.subr.mxu0 0.0
        %1567 = vmatpush2.msra.mxu0 0.0
        %1568 = vmatprep.subr.mxu0 0.0
        %1569 = vmatpush2.msra.mxu0 0.0
        %1570 = vmatprep.subr.mxu0 0.0
        %1571 = vmatpush2.msra.mxu0 0.0
        %1572 = vmatprep.subr.mxu0 0.0
        %1573 = vmatpush2.msra.mxu0 0.0
        %1574 = vmatprep.subr.mxu0 0.0
        %1575 = vmatpush2.msra.mxu0 0.0
        %1576 = vmatprep.subr.mxu0 0.0
        %1577 = vmatpush2.msra.mxu0 0.0
        %1578 = vmatprep.subr.mxu0 0.0
        %1579 = vmatpush2.msra.mxu0 0.0
        %1580 = vmatprep.subr.mxu0 0.0
        %1581 = vmatpush2.msra.mxu0 0.0
        %1582 = vmatprep.subr.mxu0 0.0
        %1583 = vmatpush2.msra.mxu0 0.0
        %1584 = vmatprep.subr.mxu0 0.0
        %1585 = vmatpush2.msra.mxu0 0.0
        %1586 = vmatprep.subr.mxu0 0.0
        %1587 = vmatpush2.msra.mxu0 0.0
        %1588 = vmatprep.subr.mxu0 0.0
        %1589 = vmatpush2.msra.mxu0 0.0
        %1590 = vmatprep.subr.mxu0 0.0
        %1591 = vmatpush2.msra.mxu0 0.0
        %1592 = vmatprep.subr.mxu0 0.0
        %1593 = vmatpush2.msra.mxu0 0.0
        %1594 = vmatprep.mubr.f32.mxu0 0.0
        %1595 = vmatmul.mubr.f32.gmra.mxu0 %v1522
        %v1596 = vpop.f32.mrf.mxu0
        %v1597 = vadd.f32 0.0, %v1596
        %v1598 = vpop.f32.mrf.mxu0
        %v1599 = vadd.f32 0.0, %v1598
        %1600 = vdwg.mxu0
        %v1601 = vadd.f32 %v1517, %v1597
        %v1602 = vadd.f32 %v1518, %v1599
        %1603 = vrot.lane.b32.xlu0 %v1136, 127
        %v1604 = vpop.permute.xlu0 %1603
        %1605 = vrot.lane.b32.xlu0 %v1137, 127
        %v1606 = vpop.permute.xlu0 %1605
        %v1607 = vsel %vm502, %v1604, %v1606
        %v1608 = vsel %vm502, %v1606, %v1604
        %v1609 = vmul.f32 %v1607, %v509
        %v1610 = vmul.f32 %v1608, %v513
        %s1611 = scalar_lea.vmem %s2, 20
        %v1612 = vld [vmem:[%s1611] sm:$0xf]
        %v1614 = vsel %vm330, %v1612, 0
        %v1617 = vsel %vm334, %v1609, 0
        %v1620 = vsel %vm334, %v1610, 0
        %1622 = vmatprep.subr.mxu0 0.0
        %1623 = vmatpush1.msra.mxu0 0.0
        %1624 = vmatprep.subr.mxu0 0.0
        %1625 = vmatpush1.msra.mxu0 0.0
        %1626 = vmatprep.subr.mxu0 0.0
        %1627 = vmatpush1.msra.mxu0 0.0
        %1628 = vmatprep.subr.mxu0 0.0
        %1629 = vmatpush1.msra.mxu0 0.0
        %1630 = vmatprep.subr.mxu0 0.0
        %1631 = vmatpush1.msra.mxu0 0.0
        %1632 = vmatprep.subr.mxu0 0.0
        %1633 = vmatpush1.msra.mxu0 0.0
        %1634 = vmatprep.subr.mxu0 0.0
        %1635 = vmatpush1.msra.mxu0 0.0
        %1636 = vmatprep.subr.mxu0 0.0
        %1637 = vmatpush1.msra.mxu0 0.0
        %1638 = vmatprep.subr.mxu0 0.0
        %1639 = vmatpush1.msra.mxu0 0.0
        %1640 = vmatprep.subr.mxu0 0.0
        %1641 = vmatpush1.msra.mxu0 0.0
        %1642 = vmatprep.subr.mxu0 0.0
        %1643 = vmatpush1.msra.mxu0 0.0
        %1644 = vmatprep.subr.mxu0 0.0
        %1645 = vmatpush1.msra.mxu0 0.0
        %1646 = vmatprep.subr.mxu0 0.0
        %1647 = vmatpush1.msra.mxu0 0.0
        %1648 = vmatprep.subr.mxu0 0.0
        %1649 = vmatpush1.msra.mxu0 0.0
        %1650 = vmatprep.subr.mxu0 0.0
        %1651 = vmatpush1.msra.mxu0 0.0
        %1652 = vmatprep.subr.mxu0 %v1620
        %1653 = vmatpush1.msra.mxu0 %v1617
        %1654 = vmatprep.subr.mxu0 0.0
        %1655 = vmatpush2.msra.mxu0 0.0
        %1656 = vmatprep.subr.mxu0 0.0
        %1657 = vmatpush2.msra.mxu0 0.0
        %1658 = vmatprep.subr.mxu0 0.0
        %1659 = vmatpush2.msra.mxu0 0.0
        %1660 = vmatprep.subr.mxu0 0.0
        %1661 = vmatpush2.msra.mxu0 0.0
        %1662 = vmatprep.subr.mxu0 0.0
        %1663 = vmatpush2.msra.mxu0 0.0
        %1664 = vmatprep.subr.mxu0 0.0
        %1665 = vmatpush2.msra.mxu0 0.0
        %1666 = vmatprep.subr.mxu0 0.0
        %1667 = vmatpush2.msra.mxu0 0.0
        %1668 = vmatprep.subr.mxu0 0.0
        %1669 = vmatpush2.msra.mxu0 0.0
        %1670 = vmatprep.subr.mxu0 0.0
        %1671 = vmatpush2.msra.mxu0 0.0
        %1672 = vmatprep.subr.mxu0 0.0
        %1673 = vmatpush2.msra.mxu0 0.0
        %1674 = vmatprep.subr.mxu0 0.0
        %1675 = vmatpush2.msra.mxu0 0.0
        %1676 = vmatprep.subr.mxu0 0.0
        %1677 = vmatpush2.msra.mxu0 0.0
        %1678 = vmatprep.subr.mxu0 0.0
        %1679 = vmatpush2.msra.mxu0 0.0
        %1680 = vmatprep.subr.mxu0 0.0
        %1681 = vmatpush2.msra.mxu0 0.0
        %1682 = vmatprep.subr.mxu0 0.0
        %1683 = vmatpush2.msra.mxu0 0.0
        %1684 = vmatprep.subr.mxu0 0.0
        %1685 = vmatpush2.msra.mxu0 0.0
        %1686 = vmatprep.mubr.f32.mxu0 0.0
        %1687 = vmatmul.mubr.f32.gmra.mxu0 %v1614
        %v1688 = vpop.f32.mrf.mxu0
        %v1689 = vadd.f32 0.0, %v1688
        %v1690 = vpop.f32.mrf.mxu0
        %v1691 = vadd.f32 0.0, %v1690
        %1692 = vdwg.mxu0
        %v1693 = vadd.f32 %v1601, %v1689
        %v1694 = vadd.f32 %v1602, %v1691
        %1695 = vrot.lane.b32.xlu0 %v1158, 1
        %v1696 = vpop.permute.xlu0 %1695
        %1697 = vrot.lane.b32.xlu0 %v1159, 1
        %v1698 = vpop.permute.xlu0 %1697
        %v1699 = vsel %vm313, %v1696, %v1698
        %v1700 = vsel %vm313, %v1698, %v1696
        %v1701 = vmul.f32 %v1700, %v320
        %v1702 = vmul.f32 %v1699, %v324
        %s1703 = scalar_lea.vmem %s2, 24
        %v1704 = vld [vmem:[%s1703] sm:$0xf]
        %v1706 = vsel %vm330, %v1704, 0
        %v1709 = vsel %vm334, %v1701, 0
        %v1712 = vsel %vm334, %v1702, 0
        %1714 = vmatprep.subr.mxu0 0.0
        %1715 = vmatpush1.msra.mxu0 0.0
        %1716 = vmatprep.subr.mxu0 0.0
        %1717 = vmatpush1.msra.mxu0 0.0
        %1718 = vmatprep.subr.mxu0 0.0
        %1719 = vmatpush1.msra.mxu0 0.0
        %1720 = vmatprep.subr.mxu0 0.0
        %1721 = vmatpush1.msra.mxu0 0.0
        %1722 = vmatprep.subr.mxu0 0.0
        %1723 = vmatpush1.msra.mxu0 0.0
        %1724 = vmatprep.subr.mxu0 0.0
        %1725 = vmatpush1.msra.mxu0 0.0
        %1726 = vmatprep.subr.mxu0 0.0
        %1727 = vmatpush1.msra.mxu0 0.0
        %1728 = vmatprep.subr.mxu0 0.0
        %1729 = vmatpush1.msra.mxu0 0.0
        %1730 = vmatprep.subr.mxu0 0.0
        %1731 = vmatpush1.msra.mxu0 0.0
        %1732 = vmatprep.subr.mxu0 0.0
        %1733 = vmatpush1.msra.mxu0 0.0
        %1734 = vmatprep.subr.mxu0 0.0
        %1735 = vmatpush1.msra.mxu0 0.0
        %1736 = vmatprep.subr.mxu0 0.0
        %1737 = vmatpush1.msra.mxu0 0.0
        %1738 = vmatprep.subr.mxu0 0.0
        %1739 = vmatpush1.msra.mxu0 0.0
        %1740 = vmatprep.subr.mxu0 0.0
        %1741 = vmatpush1.msra.mxu0 0.0
        %1742 = vmatprep.subr.mxu0 0.0
        %1743 = vmatpush1.msra.mxu0 0.0
        %1744 = vmatprep.subr.mxu0 %v1712
        %1745 = vmatpush1.msra.mxu0 %v1709
        %1746 = vmatprep.subr.mxu0 0.0
        %1747 = vmatpush2.msra.mxu0 0.0
        %1748 = vmatprep.subr.mxu0 0.0
        %1749 = vmatpush2.msra.mxu0 0.0
        %1750 = vmatprep.subr.mxu0 0.0
        %1751 = vmatpush2.msra.mxu0 0.0
        %1752 = vmatprep.subr.mxu0 0.0
        %1753 = vmatpush2.msra.mxu0 0.0
        %1754 = vmatprep.subr.mxu0 0.0
        %1755 = vmatpush2.msra.mxu0 0.0
        %1756 = vmatprep.subr.mxu0 0.0
        %1757 = vmatpush2.msra.mxu0 0.0
        %1758 = vmatprep.subr.mxu0 0.0
        %1759 = vmatpush2.msra.mxu0 0.0
        %1760 = vmatprep.subr.mxu0 0.0
        %1761 = vmatpush2.msra.mxu0 0.0
        %1762 = vmatprep.subr.mxu0 0.0
        %1763 = vmatpush2.msra.mxu0 0.0
        %1764 = vmatprep.subr.mxu0 0.0
        %1765 = vmatpush2.msra.mxu0 0.0
        %1766 = vmatprep.subr.mxu0 0.0
        %1767 = vmatpush2.msra.mxu0 0.0
        %1768 = vmatprep.subr.mxu0 0.0
        %1769 = vmatpush2.msra.mxu0 0.0
        %1770 = vmatprep.subr.mxu0 0.0
        %1771 = vmatpush2.msra.mxu0 0.0
        %1772 = vmatprep.subr.mxu0 0.0
        %1773 = vmatpush2.msra.mxu0 0.0
        %1774 = vmatprep.subr.mxu0 0.0
        %1775 = vmatpush2.msra.mxu0 0.0
        %1776 = vmatprep.subr.mxu0 0.0
        %1777 = vmatpush2.msra.mxu0 0.0
        %1778 = vmatprep.mubr.f32.mxu0 0.0
        %1779 = vmatmul.mubr.f32.gmra.mxu0 %v1706
        %v1780 = vpop.f32.mrf.mxu0
        %v1781 = vadd.f32 0.0, %v1780
        %v1782 = vpop.f32.mrf.mxu0
        %v1783 = vadd.f32 0.0, %v1782
        %1784 = vdwg.mxu0
        %v1785 = vadd.f32 %v1693, %v1781
        %v1786 = vadd.f32 %v1694, %v1783
        %s1787 = scalar_lea.vmem %s2, 28
        %v1788 = vld [vmem:[%s1787] sm:$0xf]
        %v1790 = vsel %vm330, %v1788, 0
        %v1793 = vsel %vm334, %v1158, 0
        %v1796 = vsel %vm334, %v1159, 0
        %1798 = vmatprep.subr.mxu0 0.0
        %1799 = vmatpush1.msra.mxu0 0.0
        %1800 = vmatprep.subr.mxu0 0.0
        %1801 = vmatpush1.msra.mxu0 0.0
        %1802 = vmatprep.subr.mxu0 0.0
        %1803 = vmatpush1.msra.mxu0 0.0
        %1804 = vmatprep.subr.mxu0 0.0
        %1805 = vmatpush1.msra.mxu0 0.0
        %1806 = vmatprep.subr.mxu0 0.0
        %1807 = vmatpush1.msra.mxu0 0.0
        %1808 = vmatprep.subr.mxu0 0.0
        %1809 = vmatpush1.msra.mxu0 0.0
        %1810 = vmatprep.subr.mxu0 0.0
        %1811 = vmatpush1.msra.mxu0 0.0
        %1812 = vmatprep.subr.mxu0 0.0
        %1813 = vmatpush1.msra.mxu0 0.0
        %1814 = vmatprep.subr.mxu0 0.0
        %1815 = vmatpush1.msra.mxu0 0.0
        %1816 = vmatprep.subr.mxu0 0.0
        %1817 = vmatpush1.msra.mxu0 0.0
        %1818 = vmatprep.subr.mxu0 0.0
        %1819 = vmatpush1.msra.mxu0 0.0
        %1820 = vmatprep.subr.mxu0 0.0
        %1821 = vmatpush1.msra.mxu0 0.0
        %1822 = vmatprep.subr.mxu0 0.0
        %1823 = vmatpush1.msra.mxu0 0.0
        %1824 = vmatprep.subr.mxu0 0.0
        %1825 = vmatpush1.msra.mxu0 0.0
        %1826 = vmatprep.subr.mxu0 0.0
        %1827 = vmatpush1.msra.mxu0 0.0
        %1828 = vmatprep.subr.mxu0 %v1796
        %1829 = vmatpush1.msra.mxu0 %v1793
        %1830 = vmatprep.subr.mxu0 0.0
        %1831 = vmatpush2.msra.mxu0 0.0
        %1832 = vmatprep.subr.mxu0 0.0
        %1833 = vmatpush2.msra.mxu0 0.0
        %1834 = vmatprep.subr.mxu0 0.0
        %1835 = vmatpush2.msra.mxu0 0.0
        %1836 = vmatprep.subr.mxu0 0.0
        %1837 = vmatpush2.msra.mxu0 0.0
        %1838 = vmatprep.subr.mxu0 0.0
        %1839 = vmatpush2.msra.mxu0 0.0
        %1840 = vmatprep.subr.mxu0 0.0
        %1841 = vmatpush2.msra.mxu0 0.0
        %1842 = vmatprep.subr.mxu0 0.0
        %1843 = vmatpush2.msra.mxu0 0.0
        %1844 = vmatprep.subr.mxu0 0.0
        %1845 = vmatpush2.msra.mxu0 0.0
        %1846 = vmatprep.subr.mxu0 0.0
        %1847 = vmatpush2.msra.mxu0 0.0
        %1848 = vmatprep.subr.mxu0 0.0
        %1849 = vmatpush2.msra.mxu0 0.0
        %1850 = vmatprep.subr.mxu0 0.0
        %1851 = vmatpush2.msra.mxu0 0.0
        %1852 = vmatprep.subr.mxu0 0.0
        %1853 = vmatpush2.msra.mxu0 0.0
        %1854 = vmatprep.subr.mxu0 0.0
        %1855 = vmatpush2.msra.mxu0 0.0
        %1856 = vmatprep.subr.mxu0 0.0
        %1857 = vmatpush2.msra.mxu0 0.0
        %1858 = vmatprep.subr.mxu0 0.0
        %1859 = vmatpush2.msra.mxu0 0.0
        %1860 = vmatprep.subr.mxu0 0.0
        %1861 = vmatpush2.msra.mxu0 0.0
        %1862 = vmatprep.mubr.f32.mxu0 0.0
        %1863 = vmatmul.mubr.f32.gmra.mxu0 %v1790
        %v1864 = vpop.f32.mrf.mxu0
        %v1865 = vadd.f32 0.0, %v1864
        %v1866 = vpop.f32.mrf.mxu0
        %v1867 = vadd.f32 0.0, %v1866
        %1868 = vdwg.mxu0
        %v1869 = vadd.f32 %v1785, %v1865
        %v1870 = vadd.f32 %v1786, %v1867
        %1871 = vrot.lane.b32.xlu0 %v1158, 127
        %v1872 = vpop.permute.xlu0 %1871
        %1873 = vrot.lane.b32.xlu0 %v1159, 127
        %v1874 = vpop.permute.xlu0 %1873
        %v1875 = vsel %vm502, %v1872, %v1874
        %v1876 = vsel %vm502, %v1874, %v1872
        %v1877 = vmul.f32 %v1875, %v509
        %v1878 = vmul.f32 %v1876, %v513
        %s1879 = scalar_lea.vmem %s2, 32
        %v1880 = vld [vmem:[%s1879] sm:$0xf]
        %v1882 = vsel %vm330, %v1880, 0
        %v1885 = vsel %vm334, %v1877, 0
        %v1888 = vsel %vm334, %v1878, 0
        %1890 = vmatprep.subr.mxu0 0.0
        %1891 = vmatpush1.msra.mxu0 0.0
        %1892 = vmatprep.subr.mxu0 0.0
        %1893 = vmatpush1.msra.mxu0 0.0
        %1894 = vmatprep.subr.mxu0 0.0
        %1895 = vmatpush1.msra.mxu0 0.0
        %1896 = vmatprep.subr.mxu0 0.0
        %1897 = vmatpush1.msra.mxu0 0.0
        %1898 = vmatprep.subr.mxu0 0.0
        %1899 = vmatpush1.msra.mxu0 0.0
        %1900 = vmatprep.subr.mxu0 0.0
        %1901 = vmatpush1.msra.mxu0 0.0
        %1902 = vmatprep.subr.mxu0 0.0
        %1903 = vmatpush1.msra.mxu0 0.0
        %1904 = vmatprep.subr.mxu0 0.0
        %1905 = vmatpush1.msra.mxu0 0.0
        %1906 = vmatprep.subr.mxu0 0.0
        %1907 = vmatpush1.msra.mxu0 0.0
        %1908 = vmatprep.subr.mxu0 0.0
        %1909 = vmatpush1.msra.mxu0 0.0
        %1910 = vmatprep.subr.mxu0 0.0
        %1911 = vmatpush1.msra.mxu0 0.0
        %1912 = vmatprep.subr.mxu0 0.0
        %1913 = vmatpush1.msra.mxu0 0.0
        %1914 = vmatprep.subr.mxu0 0.0
        %1915 = vmatpush1.msra.mxu0 0.0
        %1916 = vmatprep.subr.mxu0 0.0
        %1917 = vmatpush1.msra.mxu0 0.0
        %1918 = vmatprep.subr.mxu0 0.0
        %1919 = vmatpush1.msra.mxu0 0.0
        %1920 = vmatprep.subr.mxu0 %v1888
        %1921 = vmatpush1.msra.mxu0 %v1885
        %1922 = vmatprep.subr.mxu0 0.0
        %1923 = vmatpush2.msra.mxu0 0.0
        %1924 = vmatprep.subr.mxu0 0.0
        %1925 = vmatpush2.msra.mxu0 0.0
        %1926 = vmatprep.subr.mxu0 0.0
        %1927 = vmatpush2.msra.mxu0 0.0
        %1928 = vmatprep.subr.mxu0 0.0
        %1929 = vmatpush2.msra.mxu0 0.0
        %1930 = vmatprep.subr.mxu0 0.0
        %1931 = vmatpush2.msra.mxu0 0.0
        %1932 = vmatprep.subr.mxu0 0.0
        %1933 = vmatpush2.msra.mxu0 0.0
        %1934 = vmatprep.subr.mxu0 0.0
        %1935 = vmatpush2.msra.mxu0 0.0
        %1936 = vmatprep.subr.mxu0 0.0
        %1937 = vmatpush2.msra.mxu0 0.0
        %1938 = vmatprep.subr.mxu0 0.0
        %1939 = vmatpush2.msra.mxu0 0.0
        %1940 = vmatprep.subr.mxu0 0.0
        %1941 = vmatpush2.msra.mxu0 0.0
        %1942 = vmatprep.subr.mxu0 0.0
        %1943 = vmatpush2.msra.mxu0 0.0
        %1944 = vmatprep.subr.mxu0 0.0
        %1945 = vmatpush2.msra.mxu0 0.0
        %1946 = vmatprep.subr.mxu0 0.0
        %1947 = vmatpush2.msra.mxu0 0.0
        %1948 = vmatprep.subr.mxu0 0.0
        %1949 = vmatpush2.msra.mxu0 0.0
        %1950 = vmatprep.subr.mxu0 0.0
        %1951 = vmatpush2.msra.mxu0 0.0
        %1952 = vmatprep.subr.mxu0 0.0
        %1953 = vmatpush2.msra.mxu0 0.0
        %1954 = vmatprep.mubr.f32.mxu0 0.0
        %1955 = vmatmul.mubr.f32.gmra.mxu0 %v1882
        %v1956 = vpop.f32.mrf.mxu0
        %v1957 = vadd.f32 0.0, %v1956
        %v1958 = vpop.f32.mrf.mxu0
        %v1959 = vadd.f32 0.0, %v1958
        %1960 = vdwg.mxu0
        %v1961 = vadd.f32 %v1869, %v1957
        %v1962 = vadd.f32 %v1870, %v1959
        %v1963 = vadd.f32 %v1961, %v250
        %v1964 = vadd.f32 %v1962, %v265
        %v1965 = vmax.f32 %v1963, 0.0
        %v1966 = vmax.f32 %v1964, 0.0
        %v1969 = vcombine.low %v1965, %v1966
        %1971 = vst [vmem:[%s244] sm:$0xff] %v1969
        %s1972 = sand.u32 %s159, 1
        %s1973 = scalar_lea.sflag [#allocation3], %s1972
        %s1974 = sand.u32 %s159, 1
        %s1975 = smul.addr %s1974, 8
        %s1976 = scalar_lea.vmem [#allocation2], %s1975
        // Predicated region
        $region45: #{tpu_custom_call.1} parent=43 // pred_check
          %p1977 = pneg %p169
        $region46: #{tpu_custom_call.1} parent=43 // pred_check_branch
          %1979 = sbr.rel (%p1977) target = $region48
        $region47: #{tpu_custom_call.1} parent=43 // pred_region
          %s1981 = ssub.s32 128, 128
          %1982 = vsyncadd %s1973, %s1981
          %s1983 = smul.addr %s20, 2
          %s1984 = smul.addr %s1983, 64
          %s1985 = scalar_lea.hbm %s6, %s1984
          %s1987 = sshll.u32 %s1976, 4
          %s1988 = int_to_ptr.vmem [resolvable:$true] %s1987
          %1990 = dma.vmem_to_hbm [thread:$0]  %s1988, 128, %s1985, %s1973
        $region48: #{tpu_custom_call.1} parent=43 // pred_fallthru
          _
      $region44: #{tpu_custom_call.1} parent=5 // pred_fallthru
        _
      %p1991 = scmp.le.s32.totalorder 2, %s15
      // Predicated region
      $region49: #{tpu_custom_call.1} parent=5 // pred_check
        %p1992 = pneg %p1991
      $region50: #{tpu_custom_call.1} parent=5 // pred_check_branch
        %1994 = sbr.rel (%p1992) target = $region52
      $region51: #{tpu_custom_call.1} parent=5 // pred_region
        %s1995 = ssub.s32 %s15, 2
        // Predicated region
        $region53: #{tpu_custom_call.1} parent=51 // pred_check
          %p1996 = pneg %p175
        $region54: #{tpu_custom_call.1} parent=51 // pred_check_branch
          %1998 = sbr.rel (%p1996) target = $region56
        $region55: #{tpu_custom_call.1} parent=51 // pred_region
          %s1999 = sand.u32 %s160, 1
          %s2000 = scalar_lea.sflag [#allocation3], %s1999
          %s2001 = sand.u32 %s160, 1
          %s2002 = smul.addr %s2001, 8
          %s2003 = scalar_lea.vmem [#allocation2], %s2002
          %2004 = dma.done %s2000, 128
        $region56: #{tpu_custom_call.1} parent=51 // pred_fallthru
          _
      $region52: #{tpu_custom_call.1} parent=5 // pred_fallthru
        _
    $region6: #{tpu_custom_call.1} parent=1 // loop_footer
      %s19 = sadd.s32 1, %s15
    $region7: #{tpu_custom_call.1} parent=1 // loop_footer_branch
      %14 = sbr.rel target = $region3
    $region8: #{tpu_custom_call.1} parent=1 // loop_exit
      _
    %2005 = vsyncpa [#allocation3], 1
    %s2006 = scalar_lea.sflag [#allocation3], 1
    %2007 = vsyncpa %s2006, 1

</llo_original>
